<compile_context>
chip_gen: v7x
topology: tpu7x:2x2x1
jax: 0.10.0
libtpu: 0.0.40
codegen_flags: <defaults>
</compile_context>

<pallas_src>
import functools

import jax
import jax.numpy as jnp
from jax.experimental import pallas as pl
from jax.experimental.pallas import tpu as pltpu


def _rnn_chunk_kernel(x_ref, wT_ref, bw_ref, uT_ref, bu_ref, o_ref,
                      wx_ref, carry_ref):
    """One grid step = (one batch block) x (one chunk of Tc timesteps).

    Grid: (batch blocks, time chunks); time is the inner, "arbitrary" axis.

    x_ref:     (Bb, Tc, E)    batch-major input chunk   (compute dtype)
    wT_ref:    (E,  Hp)       W^T, resident / single-buffered
    bw_ref:    (1,  Hp)       W bias (f32)
    uT_ref:    (Hp, Hp)       U^T, resident / single-buffered
    bu_ref:    (1,  Hp)       U bias (f32)
    o_ref:     (Bb, Tc, Hp)   batch-major output chunk  (f32)
    wx_ref:    (Bb*Tc, Hp)    f32 staging buffer for the hoisted W projection
    carry_ref: (Bb, Hp)       f32 hidden carry t_{i-1}, persists across chunks
    """
    @pl.when(pl.program_id(1) == 0)        # first time chunk of this batch block
    def _():
        carry_ref[...] = jnp.zeros_like(carry_ref)

    bb, tc, e = x_ref.shape
    hp = o_ref.shape[-1]

    # ---- Hoisted input projection: one tall MXU matmul for the whole chunk.
    # (Bb, Tc, E) -> (Bb*Tc, E) only merges whole sublane tiles (Tc is a
    # multiple of the sublane tiling of the compute dtype), so no data moves.
    x_flat = x_ref[...].reshape(bb * tc, e)
    wx_ref[...] = (jnp.dot(x_flat, wT_ref[...],
                           preferred_element_type=jnp.float32)
                   + bw_ref[...])                                   # f32

    uT = uT_ref[...]
    # Hoist the bias broadcast out of the unrolled recurrence.
    bu = jnp.broadcast_to(bu_ref[...], (bb, hp))                    # f32

    # ---- Serial recurrence over the chunk.  Fully unrolled: tc is small and
    # static, so every slice / store is static and the scheduler sees the whole
    # tanh -> matmul chain.
    # TODO(synk): for very large Tc switch to lax.fori_loop(..., unroll=8) to
    # bound code size, and when Bb >= 16 interleave independent 8-row batch
    # sub-blocks (or drive U weight-stationary via pltpu.matmul_push_rhs) to
    # overlap the EUP tanh with the MXU matmul.
    t = carry_ref[...]                                              # (Bb, Hp) f32
    for j in range(tc):
        # Rows {b*Tc + j | b} of the staging buffer == timestep j for every
        # batch row: a strided sublane load, off the serial critical path.
        wx_j = wx_ref[pl.ds(j, bb, stride=tc), :]                   # (Bb, Hp) f32
        h = jnp.tanh(wx_j + t)                                      # EUP,  f32
        t = jnp.dot(h.astype(uT.dtype), uT,
                    preferred_element_type=jnp.float32) + bu        # MXU,  f32 acc
        o_ref[:, j, :] = t.astype(o_ref.dtype)                      # batch-major store
    carry_ref[...] = t


def _round_up(n, m):
    return ((n + m - 1) // m) * m


@functools.partial(jax.jit,
                   static_argnames=("chunk", "batch_block", "compute_dtype"))
def rnn_forward(x, w_weight, w_bias, u_weight, u_bias, *,
                chunk=32, batch_block=None, compute_dtype=jnp.bfloat16):
    """x: (B, T, E); weights follow torch.nn.Linear convention:
       w_weight (H, E), w_bias (H,), u_weight (H, H), u_bias (H,).
    Returns (t, O) with t (B, H) and O (B, T, H) float32, matching `RNN_Model`.

    compute_dtype: dtype of the MXU operands (x, W^T, U^T, h).  bfloat16
      (default) is the fast MXU path on v5e/v6e/v7x; accumulation, biases and
      the recurrent carry stay float32.  Use jnp.float32 for exact results.
    batch_block: padded-batch rows per grid step (multiple of 8).  None = all
      rows in one block.  On v7x set it so Bp/batch_block >= 2 and both
      TensorCores get independent batch slices.
    chunk: timesteps per grid step (amortizes per-step overhead and makes the
      hoisted W matmul taller); rounded to the sublane tiling.
    """
    B, T, E = x.shape
    H = w_weight.shape[0]
    f32 = jnp.float32
    csize = jnp.dtype(compute_dtype).itemsize

    Hp = _round_up(H, 128)                      # lane-dense stores / MXU columns
    tmult = max(8, 32 // csize)                 # sublane tiling of compute dtype
    Tc = min(_round_up(chunk, tmult), _round_up(T, tmult))
    Tp = _round_up(T, Tc)

    Bp = _round_up(B, 8)
    if batch_block is None:
        Bb = Bp
    else:
        Bb = max(8, _round_up(min(batch_block, Bp), 8))
        Bp = _round_up(Bp, Bb)

    # Batch-major padded operands -- no (B,T)<->(T,B) transposes anywhere.
    x_p = jnp.pad(x.astype(compute_dtype), ((0, Bp - B), (0, Tp - T), (0, 0)))
    # Zero-padding H keeps the padded lanes exactly 0 through the recurrence.
    wT = jnp.pad(w_weight.T, ((0, 0), (0, Hp - H))).astype(compute_dtype)
    uT = jnp.pad(u_weight.T, ((0, Hp - H), (0, Hp - H))).astype(compute_dtype)
    bw = jnp.pad(w_bias, (0, Hp - H)).reshape(1, Hp).astype(f32)
    bu = jnp.pad(u_bias, (0, Hp - H)).reshape(1, Hp).astype(f32)

    # VMEM budget derived from the actual blocks (generous headroom).
    vmem_bytes = (
        2 * Bb * Tc * E * csize            # x block (double-buffered)
        + 2 * Bb * Tc * Hp * 4             # output block (double-buffered, f32)
        + (E + Hp) * Hp * csize            # W^T + U^T (single-buffered)
        + 2 * 2 * Hp * 4                   # biases
        + Bb * Tc * Hp * 4                 # wx staging scratch
        + Bb * Hp * 4                      # hidden carry
    )
    vmem_limit = int(min(128 * 1024 * 1024,
                         max(2 * vmem_bytes, 16 * 1024 * 1024)))

    # Time-invariant operands: constant index map, single-buffered (the default
    # double buffer would waste the largest VMEM block, U^T).
    resident = dict(pipeline_mode=pl.Buffered(1))

    grid_spec = pltpu.PrefetchScalarGridSpec(
        num_scalar_prefetch=0,
        grid=(Bp // Bb, Tp // Tc),               # time chunks innermost (serial)
        in_specs=[
            pl.BlockSpec((Bb, Tc, E), lambda b, c: (b, c, 0)),        # x chunk
            pl.BlockSpec((E, Hp), lambda b, c: (0, 0), **resident),   # W^T
            pl.BlockSpec((1, Hp), lambda b, c: (0, 0), **resident),   # b_W
            pl.BlockSpec((Hp, Hp), lambda b, c: (0, 0), **resident),  # U^T
            pl.BlockSpec((1, Hp), lambda b, c: (0, 0), **resident),   # b_U
        ],
        out_specs=pl.BlockSpec((Bb, Tc, Hp), lambda b, c: (b, c, 0)),
        scratch_shapes=[
            pltpu.VMEM((Bb * Tc, Hp), jnp.float32),   # staged W projection
            pltpu.VMEM((Bb, Hp), jnp.float32),        # hidden carry
        ],
    )

    o_p = pl.pallas_call(
        _rnn_chunk_kernel,
        out_shape=jax.ShapeDtypeStruct((Bp, Tp, Hp), jnp.float32),
        grid_spec=grid_spec,
        compiler_params=pltpu.CompilerParams(
            # Batch blocks are independent (v7x megacore); the time axis is an
            # inherently serial recurrence.
            dimension_semantics=("parallel", "arbitrary"),
            vmem_limit_bytes=vmem_limit,
        ),
    )(x_p, wT, bw, uT, bu)

    # TODO(synk): optionally emit O in bf16 on v7x to halve output HBM traffic.
    O = o_p[:B, :T, :H]                 # (B, T, H); padded rows / steps dropped
    t = O[:, -1]                        # final state == last stored output
    return t, O


def rnn_reference(x, w_weight, w_bias, u_weight, u_bias):
    """Pure-JAX float32 reference reproducing the PyTorch loop."""
    B, T, _ = x.shape
    H = w_weight.shape[0]
    t = jnp.zeros((B, H), jnp.float32)
    outs = []
    for i in range(T):
        h = jnp.tanh(x[:, i] @ w_weight.T + w_bias + t)
        t = h @ u_weight.T + u_bias
        outs.append(t)
    return t, jnp.stack(outs, axis=1)


if __name__ == "__main__":
    B, T, E, H = 2, 8, 16, 32   # batch, seq, embedding_num, hidden_fea

    key = jax.random.PRNGKey(0)
    k1, k2, k3, k4, k5 = jax.random.split(key, 5)

    # Deterministic "nn.Linear"-style init: U(-1/sqrt(fan_in), 1/sqrt(fan_in))
    w_weight = jax.random.uniform(k1, (H, E), jnp.float32,
                                  minval=-1.0 / E ** 0.5, maxval=1.0 / E ** 0.5)
    w_bias = jax.random.uniform(k2, (H,), jnp.float32,
                                minval=-1.0 / E ** 0.5, maxval=1.0 / E ** 0.5)
    u_weight = jax.random.uniform(k3, (H, H), jnp.float32,
                                  minval=-1.0 / H ** 0.5, maxval=1.0 / H ** 0.5)
    u_bias = jax.random.uniform(k4, (H,), jnp.float32,
                                minval=-1.0 / H ** 0.5, maxval=1.0 / H ** 0.5)
    x = jax.random.normal(k5, (B, T, E), jnp.float32)

    t_ref, O_ref = rnn_reference(x, w_weight, w_bias, u_weight, u_bias)

    # Exact path (f32 MXU operands): tight tolerance vs. the reference loop.
    t32, O32 = rnn_forward(x, w_weight, w_bias, u_weight, u_bias,
                           compute_dtype=jnp.float32)
    jax.block_until_ready((t32, O32))
    assert t32.shape == (B, H) and O32.shape == (B, T, H)
    assert jnp.allclose(O32, O_ref, atol=1e-5, rtol=1e-5)
    assert jnp.allclose(t32, t_ref, atol=1e-5, rtol=1e-5)

    # Default fast path (bf16 MXU operands, f32 accumulation / activations).
    t_out, O_out = rnn_forward(x, w_weight, w_bias, u_weight, u_bias)
    jax.block_until_ready((t_out, O_out))
    assert t_out.shape == (B, H) and O_out.shape == (B, T, H)
    assert jnp.allclose(O_out, O_ref, atol=5e-2, rtol=5e-2)
    assert jnp.allclose(t_out, t_ref, atol=5e-2, rtol=5e-2)

    print("KERNEL_OK")
</pallas_src>

<mosaic_0001>
module attributes {stable_mosaic.version = 11 : i64} {
  func.func @_rnn_chunk_kernel(%arg0: i32, %arg1: i32, %arg2: memref<8x8x16xf32, #tpu.memory_space<vmem>>, %arg3: memref<16x128xf32, #tpu.memory_space<vmem>>, %arg4: memref<1x128xf32, #tpu.memory_space<vmem>>, %arg5: memref<128x128xf32, #tpu.memory_space<vmem>>, %arg6: memref<1x128xf32, #tpu.memory_space<vmem>>, %arg7: memref<8x8x128xf32, #tpu.memory_space<vmem>>, %arg8: memref<64x128xf32, #tpu.memory_space<vmem>>, %arg9: memref<8x128xf32, #tpu.memory_space<vmem>>) attributes {dimension_semantics = [#tpu.dimension_semantics<parallel>, #tpu.dimension_semantics<arbitrary>], iteration_bounds = array<i64: 1, 1>, scalar_prefetch = 0 : i64, scratch_operands = 2 : i64, tpu.core_type = #tpu.core_type<tc>, window_params = [{transform_indices = @transform_0, window_bounds = array<i64: 8, 8, 16>}, {pipeline_mode = #tpu.pipeline_mode<synchronous>, transform_indices = @transform_1, window_bounds = array<i64: 16, 128>}, {pipeline_mode = #tpu.pipeline_mode<synchronous>, transform_indices = @transform_2, window_bounds = array<i64: 1, 128>}, {pipeline_mode = #tpu.pipeline_mode<synchronous>, transform_indices = @transform_3, window_bounds = array<i64: 128, 128>}, {pipeline_mode = #tpu.pipeline_mode<synchronous>, transform_indices = @transform_4, window_bounds = array<i64: 1, 128>}, {transform_indices = @transform_5, window_bounds = array<i64: 8, 8, 128>}]} {
    %c0_i32 = arith.constant 0 : i32
    %0 = arith.cmpi eq, %arg1, %c0_i32 : i32
    %1 = arith.extui %0 : i1 to i32
    %c0_i32_0 = arith.constant 0 : i32
    %2 = arith.cmpi ne, %1, %c0_i32_0 : i32
    scf.if %2 {
      %cst_58 = arith.constant 0.000000e+00 : f32
      %81 = vector.broadcast %cst_58 : f32 to vector<8x128xf32>
      %c0_59 = arith.constant 0 : index
      %c0_60 = arith.constant 0 : index
      %82 = vector.load %arg9[%c0_59, %c0_60] : memref<8x128xf32, #tpu.memory_space<vmem>>, vector<8x128xf32>
      tpu.vector_store %arg9[%c0_59, %c0_60], %81 {strides = array<i32>} : memref<8x128xf32, #tpu.memory_space<vmem>>, vector<8x128xf32>,
    } else {
    }
    %c0 = arith.constant 0 : index
    %c0_1 = arith.constant 0 : index
    %c0_2 = arith.constant 0 : index
    %3 = vector.load %arg2[%c0, %c0_1, %c0_2] : memref<8x8x16xf32, #tpu.memory_space<vmem>>, vector<8x8x16xf32>
    %4 = vector.shape_cast %3 : vector<8x8x16xf32> to vector<64x16xf32>
    %c0_3 = arith.constant 0 : index
    %c0_4 = arith.constant 0 : index
    %5 = vector.load %arg3[%c0_3, %c0_4] : memref<16x128xf32, #tpu.memory_space<vmem>>, vector<16x128xf32>
    %cst = arith.constant dense<0.000000e+00> : vector<64x128xf32>
    %6 = tpu.matmul %4, %5, %cst {dimension_numbers = #tpu.dot_dimension_numbers<[1], [0], [0], [1], [0, 0, 1, 1], [], []>} : vector<64x16xf32>, vector<16x128xf32>, vector<64x128xf32> -> vector<64x128xf32>
    %c0_5 = arith.constant 0 : index
    %c0_6 = arith.constant 0 : index
    %7 = vector.load %arg4[%c0_5, %c0_6] : memref<1x128xf32, #tpu.memory_space<vmem>>, vector<1x128xf32>
    %8 = vector.broadcast %7 : vector<1x128xf32> to vector<64x128xf32>
    %9 = arith.addf %6, %8 : vector<64x128xf32>
    %c0_7 = arith.constant 0 : index
    %c0_8 = arith.constant 0 : index
    %10 = vector.load %arg8[%c0_7, %c0_8] : memref<64x128xf32, #tpu.memory_space<vmem>>, vector<64x128xf32>
    tpu.vector_store %arg8[%c0_7, %c0_8], %9 {strides = array<i32>} : memref<64x128xf32, #tpu.memory_space<vmem>>, vector<64x128xf32>,
    %c0_9 = arith.constant 0 : index
    %c0_10 = arith.constant 0 : index
    %11 = vector.load %arg5[%c0_9, %c0_10] : memref<128x128xf32, #tpu.memory_space<vmem>>, vector<128x128xf32>
    %c0_11 = arith.constant 0 : index
    %c0_12 = arith.constant 0 : index
    %12 = vector.load %arg6[%c0_11, %c0_12] : memref<1x128xf32, #tpu.memory_space<vmem>>, vector<1x128xf32>
    %13 = vector.shape_cast %12 : vector<1x128xf32> to vector<1x128xf32>
    %14 = vector.broadcast %13 : vector<1x128xf32> to vector<8x128xf32>
    %c0_13 = arith.constant 0 : index
    %c0_14 = arith.constant 0 : index
    %15 = vector.load %arg9[%c0_13, %c0_14] : memref<8x128xf32, #tpu.memory_space<vmem>>, vector<8x128xf32>
    %c0_15 = arith.constant 0 : index
    %c0_16 = arith.constant 0 : index
    %16 = tpu.strided_load %arg8[%c0_15, %c0_16] {strides = array<i32: 8, 1>} : memref<64x128xf32, #tpu.memory_space<vmem>>, vector<8x128xf32>
    %17 = arith.addf %16, %15 : vector<8x128xf32>
    %18 = math.tanh %17 : vector<8x128xf32>
    %cst_17 = arith.constant dense<0.000000e+00> : vector<8x128xf32>
    %19 = tpu.matmul %18, %11, %cst_17 {dimension_numbers = #tpu.dot_dimension_numbers<[1], [0], [0], [1], [0, 0, 1, 1], [], []>} : vector<8x128xf32>, vector<128x128xf32>, vector<8x128xf32> -> vector<8x128xf32>
    %20 = arith.addf %19, %14 : vector<8x128xf32>
    %c0_18 = arith.constant 0 : index
    %c0_19 = arith.constant 0 : index
    %c0_20 = arith.constant 0 : index
    %21 = vector.load %arg7[%c0_18, %c0_19, %c0_20] : memref<8x8x128xf32, #tpu.memory_space<vmem>>, vector<8x1x128xf32>
    %22 = vector.shape_cast %21 : vector<8x1x128xf32> to vector<8x128xf32>
    %23 = vector.shape_cast %20 : vector<8x128xf32> to vector<8x1x128xf32>
    tpu.vector_store %arg7[%c0_18, %c0_19, %c0_20], %23 {strides = array<i32>} : memref<8x8x128xf32, #tpu.memory_space<vmem>>, vector<8x1x128xf32>,
    %c1 = arith.constant 1 : index
    %c0_21 = arith.constant 0 : index
    %24 = tpu.strided_load %arg8[%c1, %c0_21] {strides = array<i32: 8, 1>} : memref<64x128xf32, #tpu.memory_space<vmem>>, vector<8x128xf32>
    %25 = arith.addf %24, %20 : vector<8x128xf32>
    %26 = math.tanh %25 : vector<8x128xf32>
    %cst_22 = arith.constant dense<0.000000e+00> : vector<8x128xf32>
    %27 = tpu.matmul %26, %11, %cst_22 {dimension_numbers = #tpu.dot_dimension_numbers<[1], [0], [0], [1], [0, 0, 1, 1], [], []>} : vector<8x128xf32>, vector<128x128xf32>, vector<8x128xf32> -> vector<8x128xf32>
    %28 = arith.addf %27, %14 : vector<8x128xf32>
    %c0_23 = arith.constant 0 : index
    %c1_24 = arith.constant 1 : index
    %c0_25 = arith.constant 0 : index
    %29 = vector.load %arg7[%c0_23, %c1_24, %c0_25] : memref<8x8x128xf32, #tpu.memory_space<vmem>>, vector<8x1x128xf32>
    %30 = vector.shape_cast %29 : vector<8x1x128xf32> to vector<8x128xf32>
    %31 = vector.shape_cast %28 : vector<8x128xf32> to vector<8x1x128xf32>
    tpu.vector_store %arg7[%c0_23, %c1_24, %c0_25], %31 {strides = array<i32>} : memref<8x8x128xf32, #tpu.memory_space<vmem>>, vector<8x1x128xf32>,
    %c2 = arith.constant 2 : index
    %c0_26 = arith.constant 0 : index
    %32 = tpu.strided_load %arg8[%c2, %c0_26] {strides = array<i32: 8, 1>} : memref<64x128xf32, #tpu.memory_space<vmem>>, vector<8x128xf32>
    %33 = arith.addf %32, %28 : vector<8x128xf32>
    %34 = math.tanh %33 : vector<8x128xf32>
    %cst_27 = arith.constant dense<0.000000e+00> : vector<8x128xf32>
    %35 = tpu.matmul %34, %11, %cst_27 {dimension_numbers = #tpu.dot_dimension_numbers<[1], [0], [0], [1], [0, 0, 1, 1], [], []>} : vector<8x128xf32>, vector<128x128xf32>, vector<8x128xf32> -> vector<8x128xf32>
    %36 = arith.addf %35, %14 : vector<8x128xf32>
    %c0_28 = arith.constant 0 : index
    %c2_29 = arith.constant 2 : index
    %c0_30 = arith.constant 0 : index
    %37 = vector.load %arg7[%c0_28, %c2_29, %c0_30] : memref<8x8x128xf32, #tpu.memory_space<vmem>>, vector<8x1x128xf32>
    %38 = vector.shape_cast %37 : vector<8x1x128xf32> to vector<8x128xf32>
    %39 = vector.shape_cast %36 : vector<8x128xf32> to vector<8x1x128xf32>
    tpu.vector_store %arg7[%c0_28, %c2_29, %c0_30], %39 {strides = array<i32>} : memref<8x8x128xf32, #tpu.memory_space<vmem>>, vector<8x1x128xf32>,
    %c3 = arith.constant 3 : index
    %c0_31 = arith.constant 0 : index
    %40 = tpu.strided_load %arg8[%c3, %c0_31] {strides = array<i32: 8, 1>} : memref<64x128xf32, #tpu.memory_space<vmem>>, vector<8x128xf32>
    %41 = arith.addf %40, %36 : vector<8x128xf32>
    %42 = math.tanh %41 : vector<8x128xf32>
    %cst_32 = arith.constant dense<0.000000e+00> : vector<8x128xf32>
    %43 = tpu.matmul %42, %11, %cst_32 {dimension_numbers = #tpu.dot_dimension_numbers<[1], [0], [0], [1], [0, 0, 1, 1], [], []>} : vector<8x128xf32>, vector<128x128xf32>, vector<8x128xf32> -> vector<8x128xf32>
    %44 = arith.addf %43, %14 : vector<8x128xf32>
    %c0_33 = arith.constant 0 : index
    %c3_34 = arith.constant 3 : index
    %c0_35 = arith.constant 0 : index
    %45 = vector.load %arg7[%c0_33, %c3_34, %c0_35] : memref<8x8x128xf32, #tpu.memory_space<vmem>>, vector<8x1x128xf32>
    %46 = vector.shape_cast %45 : vector<8x1x128xf32> to vector<8x128xf32>
    %47 = vector.shape_cast %44 : vector<8x128xf32> to vector<8x1x128xf32>
    tpu.vector_store %arg7[%c0_33, %c3_34, %c0_35], %47 {strides = array<i32>} : memref<8x8x128xf32, #tpu.memory_space<vmem>>, vector<8x1x128xf32>,
    %c4 = arith.constant 4 : index
    %c0_36 = arith.constant 0 : index
    %48 = tpu.strided_load %arg8[%c4, %c0_36] {strides = array<i32: 8, 1>} : memref<64x128xf32, #tpu.memory_space<vmem>>, vector<8x128xf32>
    %49 = arith.addf %48, %44 : vector<8x128xf32>
    %50 = math.tanh %49 : vector<8x128xf32>
    %cst_37 = arith.constant dense<0.000000e+00> : vector<8x128xf32>
    %51 = tpu.matmul %50, %11, %cst_37 {dimension_numbers = #tpu.dot_dimension_numbers<[1], [0], [0], [1], [0, 0, 1, 1], [], []>} : vector<8x128xf32>, vector<128x128xf32>, vector<8x128xf32> -> vector<8x128xf32>
    %52 = arith.addf %51, %14 : vector<8x128xf32>
    %c0_38 = arith.constant 0 : index
    %c4_39 = arith.constant 4 : index
    %c0_40 = arith.constant 0 : index
    %53 = vector.load %arg7[%c0_38, %c4_39, %c0_40] : memref<8x8x128xf32, #tpu.memory_space<vmem>>, vector<8x1x128xf32>
    %54 = vector.shape_cast %53 : vector<8x1x128xf32> to vector<8x128xf32>
    %55 = vector.shape_cast %52 : vector<8x128xf32> to vector<8x1x128xf32>
    tpu.vector_store %arg7[%c0_38, %c4_39, %c0_40], %55 {strides = array<i32>} : memref<8x8x128xf32, #tpu.memory_space<vmem>>, vector<8x1x128xf32>,
    %c5 = arith.constant 5 : index
    %c0_41 = arith.constant 0 : index
    %56 = tpu.strided_load %arg8[%c5, %c0_41] {strides = array<i32: 8, 1>} : memref<64x128xf32, #tpu.memory_space<vmem>>, vector<8x128xf32>
    %57 = arith.addf %56, %52 : vector<8x128xf32>
    %58 = math.tanh %57 : vector<8x128xf32>
    %cst_42 = arith.constant dense<0.000000e+00> : vector<8x128xf32>
    %59 = tpu.matmul %58, %11, %cst_42 {dimension_numbers = #tpu.dot_dimension_numbers<[1], [0], [0], [1], [0, 0, 1, 1], [], []>} : vector<8x128xf32>, vector<128x128xf32>, vector<8x128xf32> -> vector<8x128xf32>
    %60 = arith.addf %59, %14 : vector<8x128xf32>
    %c0_43 = arith.constant 0 : index
    %c5_44 = arith.constant 5 : index
    %c0_45 = arith.constant 0 : index
    %61 = vector.load %arg7[%c0_43, %c5_44, %c0_45] : memref<8x8x128xf32, #tpu.memory_space<vmem>>, vector<8x1x128xf32>
    %62 = vector.shape_cast %61 : vector<8x1x128xf32> to vector<8x128xf32>
    %63 = vector.shape_cast %60 : vector<8x128xf32> to vector<8x1x128xf32>
    tpu.vector_store %arg7[%c0_43, %c5_44, %c0_45], %63 {strides = array<i32>} : memref<8x8x128xf32, #tpu.memory_space<vmem>>, vector<8x1x128xf32>,
    %c6 = arith.constant 6 : index
    %c0_46 = arith.constant 0 : index
    %64 = tpu.strided_load %arg8[%c6, %c0_46] {strides = array<i32: 8, 1>} : memref<64x128xf32, #tpu.memory_space<vmem>>, vector<8x128xf32>
    %65 = arith.addf %64, %60 : vector<8x128xf32>
    %66 = math.tanh %65 : vector<8x128xf32>
    %cst_47 = arith.constant dense<0.000000e+00> : vector<8x128xf32>
    %67 = tpu.matmul %66, %11, %cst_47 {dimension_numbers = #tpu.dot_dimension_numbers<[1], [0], [0], [1], [0, 0, 1, 1], [], []>} : vector<8x128xf32>, vector<128x128xf32>, vector<8x128xf32> -> vector<8x128xf32>
    %68 = arith.addf %67, %14 : vector<8x128xf32>
    %c0_48 = arith.constant 0 : index
    %c6_49 = arith.constant 6 : index
    %c0_50 = arith.constant 0 : index
    %69 = vector.load %arg7[%c0_48, %c6_49, %c0_50] : memref<8x8x128xf32, #tpu.memory_space<vmem>>, vector<8x1x128xf32>
    %70 = vector.shape_cast %69 : vector<8x1x128xf32> to vector<8x128xf32>
    %71 = vector.shape_cast %68 : vector<8x128xf32> to vector<8x1x128xf32>
    tpu.vector_store %arg7[%c0_48, %c6_49, %c0_50], %71 {strides = array<i32>} : memref<8x8x128xf32, #tpu.memory_space<vmem>>, vector<8x1x128xf32>,
    %c7 = arith.constant 7 : index
    %c0_51 = arith.constant 0 : index
    %72 = tpu.strided_load %arg8[%c7, %c0_51] {strides = array<i32: 8, 1>} : memref<64x128xf32, #tpu.memory_space<vmem>>, vector<8x128xf32>
    %73 = arith.addf %72, %68 : vector<8x128xf32>
    %74 = math.tanh %73 : vector<8x128xf32>
    %cst_52 = arith.constant dense<0.000000e+00> : vector<8x128xf32>
    %75 = tpu.matmul %74, %11, %cst_52 {dimension_numbers = #tpu.dot_dimension_numbers<[1], [0], [0], [1], [0, 0, 1, 1], [], []>} : vector<8x128xf32>, vector<128x128xf32>, vector<8x128xf32> -> vector<8x128xf32>
    %76 = arith.addf %75, %14 : vector<8x128xf32>
    %c0_53 = arith.constant 0 : index
    %c7_54 = arith.constant 7 : index
    %c0_55 = arith.constant 0 : index
    %77 = vector.load %arg7[%c0_53, %c7_54, %c0_55] : memref<8x8x128xf32, #tpu.memory_space<vmem>>, vector<8x1x128xf32>
    %78 = vector.shape_cast %77 : vector<8x1x128xf32> to vector<8x128xf32>
    %79 = vector.shape_cast %76 : vector<8x128xf32> to vector<8x1x128xf32>
    tpu.vector_store %arg7[%c0_53, %c7_54, %c0_55], %79 {strides = array<i32>} : memref<8x8x128xf32, #tpu.memory_space<vmem>>, vector<8x1x128xf32>,
    %c0_56 = arith.constant 0 : index
    %c0_57 = arith.constant 0 : index
    %80 = vector.load %arg9[%c0_56, %c0_57] : memref<8x128xf32, #tpu.memory_space<vmem>>, vector<8x128xf32>
    tpu.vector_store %arg9[%c0_56, %c0_57], %76 {strides = array<i32>} : memref<8x128xf32, #tpu.memory_space<vmem>>, vector<8x128xf32>,
    return
  }
  func.func @transform_0(%arg0: i32, %arg1: i32) -> (i32, i32, i32) {
    %c0_i32 = arith.constant 0 : i32
    %c0_i32_0 = arith.constant 0 : i32
    return %arg0, %arg1, %c0_i32 : i32, i32, i32
  }
  func.func @transform_1(%arg0: i32, %arg1: i32) -> (i32, i32) {
    %c0_i32 = arith.constant 0 : i32
    %c0_i32_0 = arith.constant 0 : i32
    %c0_i32_1 = arith.constant 0 : i32
    return %c0_i32, %c0_i32_0 : i32, i32
  }
  func.func @transform_2(%arg0: i32, %arg1: i32) -> (i32, i32) {
    %c0_i32 = arith.constant 0 : i32
    %c0_i32_0 = arith.constant 0 : i32
    %c0_i32_1 = arith.constant 0 : i32
    return %c0_i32, %c0_i32_0 : i32, i32
  }
  func.func @transform_3(%arg0: i32, %arg1: i32) -> (i32, i32) {
    %c0_i32 = arith.constant 0 : i32
    %c0_i32_0 = arith.constant 0 : i32
    %c0_i32_1 = arith.constant 0 : i32
    return %c0_i32, %c0_i32_0 : i32, i32
  }
  func.func @transform_4(%arg0: i32, %arg1: i32) -> (i32, i32) {
    %c0_i32 = arith.constant 0 : i32
    %c0_i32_0 = arith.constant 0 : i32
    %c0_i32_1 = arith.constant 0 : i32
    return %c0_i32, %c0_i32_0 : i32, i32
  }
  func.func @transform_5(%arg0: i32, %arg1: i32) -> (i32, i32, i32) {
    %c0_i32 = arith.constant 0 : i32
    %c0_i32_0 = arith.constant 0 : i32
    return %arg0, %arg1, %c0_i32 : i32, i32, i32
  }
}

</mosaic_0001>

<llo_original>
// kernel: rnn_forward.1
$region0: #{rnn_forward.1}
  #allocation0 [shape = 'u32[]', space=smem, size = 0x4, offset = 0x4, fixed_abs, tag = 'smem constant byte address 0x4 - core index']
  #allocation1 [shape = 'u32[144,128]{1,0:T(1,128)}', space=vmem, size = 0x12000, scoped, tag = 'internal scratch']
  #allocation2 [shape = 'f32[64,128]{1,0:T(8,128)}', space=vmem, size = 0x8000, scoped, tag = 'scratch operand']
  #allocation3 [shape = 'f32[8,128]{1,0:T(8,128)}', space=vmem, size = 0x1000, scoped, tag = 'scratch operand']
  %s0 = inlined_call_operand.vmem [shape: f32[8,8,16], index: 0, kind: input, shape index: {}]
  %s1 = inlined_call_operand.vmem [shape: f32[16,128], index: 1, kind: input, shape index: {}]
  %s2 = inlined_call_operand.vmem [shape: f32[1,128], index: 2, kind: input, shape index: {}]
  %s3 = inlined_call_operand.vmem [shape: f32[128,128], index: 3, kind: input, shape index: {}]
  %s4 = inlined_call_operand.vmem [shape: f32[1,128], index: 4, kind: input, shape index: {}]
  %s5 = inlined_call_operand.vmem [shape: f32[8,8,128], index: 5, kind: output, shape index: {}]
  %s6 = sld [smem:[#allocation0]]
  $region34: #{rnn_forward.1} parent=0
    _
  %s8 = ssub.s32 1, %s6
  %s9 = scalar_select 0, %s8, %s6
  // Predicated region
  $region2: #{rnn_forward.1} parent=0 // pred_check
    _
  $region3: #{rnn_forward.1} parent=0 // pred_check_branch
    %11 = sbr.rel (0) target = $region5
  $region4: #{rnn_forward.1} parent=0 // pred_region
    _
  $region5: #{rnn_forward.1} parent=0 // pred_fallthru
    _
  // Predicated region
  $region6: #{rnn_forward.1} parent=0 // pred_check
    _
  $region7: #{rnn_forward.1} parent=0 // pred_check_branch
    %13 = sbr.rel (0) target = $region9
  $region8: #{rnn_forward.1} parent=0 // pred_region
    _
  $region9: #{rnn_forward.1} parent=0 // pred_fallthru
    _
  // Predicated region
  $region10: #{rnn_forward.1} parent=0 // pred_check
    _
  $region11: #{rnn_forward.1} parent=0 // pred_check_branch
    %15 = sbr.rel (0) target = $region13
  $region12: #{rnn_forward.1} parent=0 // pred_region
    _
  $region13: #{rnn_forward.1} parent=0 // pred_fallthru
    _
  // Predicated region
  $region14: #{rnn_forward.1} parent=0 // pred_check
    _
  $region15: #{rnn_forward.1} parent=0 // pred_check_branch
    %17 = sbr.rel (0) target = $region17
  $region16: #{rnn_forward.1} parent=0 // pred_region
    _
  $region17: #{rnn_forward.1} parent=0 // pred_fallthru
    _
  // Predicated region
  $region18: #{rnn_forward.1} parent=0 // pred_check
    _
  $region19: #{rnn_forward.1} parent=0 // pred_check_branch
    %19 = sbr.rel (0) target = $region21
  $region20: #{rnn_forward.1} parent=0 // pred_region
    _
  $region21: #{rnn_forward.1} parent=0 // pred_fallthru
    _
  %p20 = scmp.eq.s32.totalorder 0, 0
  // Predicated region
  $region22: #{rnn_forward.1} parent=0 // pred_check
    %p21 = pneg %p20
  $region23: #{rnn_forward.1} parent=0 // pred_check_branch
    %23 = sbr.rel (%p21) target = $region25
  $region24: #{rnn_forward.1} parent=0 // pred_region
    %24 = vst [vmem:[#allocation3] sm:$0xff] 0.0
  $region25: #{rnn_forward.1} parent=0 // pred_fallthru
    _
  %v25 = vld [vmem:[%s0] sm:$0xff]
  %v26 = vld [vmem:[%s0 + $0x8] sm:$0xff]
  %v27 = vld [vmem:[%s0 + $0x10] sm:$0xff]
  %v28 = vld [vmem:[%s0 + $0x18] sm:$0xff]
  %v29 = vld [vmem:[%s0 + $0x20] sm:$0xff]
  %v30 = vld [vmem:[%s0 + $0x28] sm:$0xff]
  %v31 = vld [vmem:[%s0 + $0x30] sm:$0xff]
  %v32 = vld [vmem:[%s0 + $0x38] sm:$0xff]
  %v33 = vld [vmem:[%s1] sm:$0xff]
  %v34 = vld [vmem:[%s1 + $0x8] sm:$0xff]
  %v35 = vld [vmem:[%s2] sm:$0x1]
  %v37 = vlaneseq
  %v38 = vshrl.u32 %v37, 7
  %v39 = vsub.s32 0, %v38
  %v40 = vrot.slane %v35, %v39
  %vm42 = vcmask 130048
  %v44 = vsel %vm42, %v25, 0
  %v47 = vsel %vm42, %v26, 0
  %v50 = vsel %vm42, %v27, 0
  %v53 = vsel %vm42, %v28, 0
  %v56 = vsel %vm42, %v29, 0
  %v59 = vsel %vm42, %v30, 0
  %v62 = vsel %vm42, %v31, 0
  %v65 = vsel %vm42, %v32, 0
  %67 = vmatprep.subr.mxu0 0.0
  %68 = vmatpush1.msra.mxu0 %v33
  %69 = vmatprep.subr.mxu0 0.0
  %70 = vmatpush1.msra.mxu0 %v34
  %71 = vmatprep.subr.mxu0 0.0
  %72 = vmatpush1.msra.mxu0 0.0
  %73 = vmatprep.subr.mxu0 0.0
  %74 = vmatpush1.msra.mxu0 0.0
  %75 = vmatprep.subr.mxu0 0.0
  %76 = vmatpush1.msra.mxu0 0.0
  %77 = vmatprep.subr.mxu0 0.0
  %78 = vmatpush1.msra.mxu0 0.0
  %79 = vmatprep.subr.mxu0 0.0
  %80 = vmatpush1.msra.mxu0 0.0
  %81 = vmatprep.subr.mxu0 0.0
  %82 = vmatpush1.msra.mxu0 0.0
  %83 = vmatprep.subr.mxu0 0.0
  %84 = vmatpush1.msra.mxu0 0.0
  %85 = vmatprep.subr.mxu0 0.0
  %86 = vmatpush1.msra.mxu0 0.0
  %87 = vmatprep.subr.mxu0 0.0
  %88 = vmatpush1.msra.mxu0 0.0
  %89 = vmatprep.subr.mxu0 0.0
  %90 = vmatpush1.msra.mxu0 0.0
  %91 = vmatprep.subr.mxu0 0.0
  %92 = vmatpush1.msra.mxu0 0.0
  %93 = vmatprep.subr.mxu0 0.0
  %94 = vmatpush1.msra.mxu0 0.0
  %95 = vmatprep.subr.mxu0 0.0
  %96 = vmatpush1.msra.mxu0 0.0
  %97 = vmatprep.subr.mxu0 0.0
  %98 = vmatpush1.msra.mxu0 0.0
  %99 = vmatprep.subr.mxu0 0.0
  %100 = vmatpush1.msra.mxu0 0.0
  %101 = vmatprep.subr.mxu0 0.0
  %102 = vmatpush1.msra.mxu0 0.0
  %103 = vmatprep.subr.mxu0 0.0
  %104 = vmatpush1.msra.mxu0 0.0
  %105 = vmatprep.subr.mxu0 0.0
  %106 = vmatpush1.msra.mxu0 0.0
  %107 = vmatprep.subr.mxu0 0.0
  %108 = vmatpush1.msra.mxu0 0.0
  %109 = vmatprep.subr.mxu0 0.0
  %110 = vmatpush1.msra.mxu0 0.0
  %111 = vmatprep.subr.mxu0 0.0
  %112 = vmatpush1.msra.mxu0 0.0
  %113 = vmatprep.subr.mxu0 0.0
  %114 = vmatpush1.msra.mxu0 0.0
  %115 = vmatprep.subr.mxu0 0.0
  %116 = vmatpush1.msra.mxu0 0.0
  %117 = vmatprep.subr.mxu0 0.0
  %118 = vmatpush1.msra.mxu0 0.0
  %119 = vmatprep.subr.mxu0 0.0
  %120 = vmatpush1.msra.mxu0 0.0
  %121 = vmatprep.subr.mxu0 0.0
  %122 = vmatpush1.msra.mxu0 0.0
  %123 = vmatprep.subr.mxu0 0.0
  %124 = vmatpush1.msra.mxu0 0.0
  %125 = vmatprep.subr.mxu0 0.0
  %126 = vmatpush1.msra.mxu0 0.0
  %127 = vmatprep.subr.mxu0 0.0
  %128 = vmatpush1.msra.mxu0 0.0
  %129 = vmatprep.subr.mxu0 0.0
  %130 = vmatpush1.msra.mxu0 0.0
  %131 = vmatprep.mubr.f32.mxu0 0.0
  %132 = vmatmul.mubr.f32.gmra.mrb[0].mxu0 %v44
  %v133 = vpop.f32.mrb[0].mxu0
  %v134 = vadd.f32 %v40, %v133
  %v135 = vpop.f32.mrb[0].mxu0
  %136 = vmatprep.mubr.f32.mxu0 0.0
  %137 = vmatmul.mubr.f32.gmra.mrb[0].mxu0 %v47
  %v138 = vpop.f32.mrb[0].mxu0
  %v139 = vadd.f32 %v40, %v138
  %v140 = vpop.f32.mrb[0].mxu0
  %141 = vmatprep.mubr.f32.mxu0 0.0
  %142 = vmatmul.mubr.f32.gmra.mrb[0].mxu0 %v50
  %v143 = vpop.f32.mrb[0].mxu0
  %v144 = vadd.f32 %v40, %v143
  %v145 = vpop.f32.mrb[0].mxu0
  %146 = vmatprep.mubr.f32.mxu0 0.0
  %147 = vmatmul.mubr.f32.gmra.mrb[0].mxu0 %v53
  %v148 = vpop.f32.mrb[0].mxu0
  %v149 = vadd.f32 %v40, %v148
  %v150 = vpop.f32.mrb[0].mxu0
  %151 = vmatprep.mubr.f32.mxu0 0.0
  %152 = vmatmul.mubr.f32.gmra.mrb[0].mxu0 %v56
  %v153 = vpop.f32.mrb[0].mxu0
  %v154 = vadd.f32 %v40, %v153
  %v155 = vpop.f32.mrb[0].mxu0
  %156 = vmatprep.mubr.f32.mxu0 0.0
  %157 = vmatmul.mubr.f32.gmra.mrb[0].mxu0 %v59
  %v158 = vpop.f32.mrb[0].mxu0
  %v159 = vadd.f32 %v40, %v158
  %v160 = vpop.f32.mrb[0].mxu0
  %161 = vmatprep.mubr.f32.mxu0 0.0
  %162 = vmatmul.mubr.f32.gmra.mrb[0].mxu0 %v62
  %v163 = vpop.f32.mrb[0].mxu0
  %v164 = vadd.f32 %v40, %v163
  %v165 = vpop.f32.mrb[0].mxu0
  %166 = vmatprep.mubr.f32.mxu0 0.0
  %167 = vmatmul.mubr.f32.gmra.mrb[0].mxu0 %v65
  %v168 = vpop.f32.mrb[0].mxu0
  %v169 = vadd.f32 %v40, %v168
  %v170 = vpop.f32.mrb[0].mxu0
  %171 = vdwg.mxu0
  %172 = vst [vmem:[#allocation2] sm:$0xff] %v134
  %173 = vst [vmem:[#allocation2 + $0x8] sm:$0xff] %v139
  %174 = vst [vmem:[#allocation2 + $0x10] sm:$0xff] %v144
  %175 = vst [vmem:[#allocation2 + $0x18] sm:$0xff] %v149
  %176 = vst [vmem:[#allocation2 + $0x20] sm:$0xff] %v154
  %177 = vst [vmem:[#allocation2 + $0x28] sm:$0xff] %v159
  %178 = vst [vmem:[#allocation2 + $0x30] sm:$0xff] %v164
  %179 = vst [vmem:[#allocation2 + $0x38] sm:$0xff] %v169
  %v180 = vld [vmem:[%s3] sm:$0xff]
  %v181 = vld [vmem:[%s3 + $0x8] sm:$0xff]
  %v182 = vld [vmem:[%s3 + $0x10] sm:$0xff]
  %v183 = vld [vmem:[%s3 + $0x18] sm:$0xff]
  %v184 = vld [vmem:[%s3 + $0x20] sm:$0xff]
  %v185 = vld [vmem:[%s3 + $0x28] sm:$0xff]
  %v186 = vld [vmem:[%s3 + $0x30] sm:$0xff]
  %v187 = vld [vmem:[%s3 + $0x38] sm:$0xff]
  %v188 = vld [vmem:[%s3 + $0x40] sm:$0xff]
  %v189 = vld [vmem:[%s3 + $0x48] sm:$0xff]
  %v190 = vld [vmem:[%s3 + $0x50] sm:$0xff]
  %v191 = vld [vmem:[%s3 + $0x58] sm:$0xff]
  %v192 = vld [vmem:[%s3 + $0x60] sm:$0xff]
  %v193 = vld [vmem:[%s3 + $0x68] sm:$0xff]
  %v194 = vld [vmem:[%s3 + $0x70] sm:$0xff]
  %v195 = vld [vmem:[%s3 + $0x78] sm:$0xff]
  %v196 = vld [vmem:[%s4] sm:$0x1]
  %v198 = vlaneseq
  %v199 = vshrl.u32 %v198, 7
  %v200 = vsub.s32 0, %v199
  %v201 = vrot.slane %v196, %v200
  %v203 = vld [vmem:[#allocation3] sm:$0xff]
  %v204 = vld [vmem:[#allocation2] ss:$8 sm:$0xf]
  %v205 = vld [vmem:[#allocation2] ss:$8 sm:$0xf0]
  %v206 = vor.u32 %v204, %v205
  %v207 = vadd.f32 %v206, %v203
  %v208 = vtanh.pop %v207
  %209 = vmatprep.subr.mxu0 0.0
  %210 = vmatpush1.msra.mxu0 %v180
  %211 = vmatprep.subr.mxu0 0.0
  %212 = vmatpush1.msra.mxu0 %v181
  %213 = vmatprep.subr.mxu0 0.0
  %214 = vmatpush1.msra.mxu0 %v182
  %215 = vmatprep.subr.mxu0 0.0
  %216 = vmatpush1.msra.mxu0 %v183
  %217 = vmatprep.subr.mxu0 0.0
  %218 = vmatpush1.msra.mxu0 %v184
  %219 = vmatprep.subr.mxu0 0.0
  %220 = vmatpush1.msra.mxu0 %v185
  %221 = vmatprep.subr.mxu0 0.0
  %222 = vmatpush1.msra.mxu0 %v186
  %223 = vmatprep.subr.mxu0 0.0
  %224 = vmatpush1.msra.mxu0 %v187
  %225 = vmatprep.subr.mxu0 0.0
  %226 = vmatpush1.msra.mxu0 %v188
  %227 = vmatprep.subr.mxu0 0.0
  %228 = vmatpush1.msra.mxu0 %v189
  %229 = vmatprep.subr.mxu0 0.0
  %230 = vmatpush1.msra.mxu0 %v190
  %231 = vmatprep.subr.mxu0 0.0
  %232 = vmatpush1.msra.mxu0 %v191
  %233 = vmatprep.subr.mxu0 0.0
  %234 = vmatpush1.msra.mxu0 %v192
  %235 = vmatprep.subr.mxu0 0.0
  %236 = vmatpush1.msra.mxu0 %v193
  %237 = vmatprep.subr.mxu0 0.0
  %238 = vmatpush1.msra.mxu0 %v194
  %239 = vmatprep.subr.mxu0 0.0
  %240 = vmatpush1.msra.mxu0 %v195
  %241 = vmatprep.subr.mxu0 0.0
  %242 = vmatpush1.msra.mxu0 0.0
  %243 = vmatprep.subr.mxu0 0.0
  %244 = vmatpush1.msra.mxu0 0.0
  %245 = vmatprep.subr.mxu0 0.0
  %246 = vmatpush1.msra.mxu0 0.0
  %247 = vmatprep.subr.mxu0 0.0
  %248 = vmatpush1.msra.mxu0 0.0
  %249 = vmatprep.subr.mxu0 0.0
  %250 = vmatpush1.msra.mxu0 0.0
  %251 = vmatprep.subr.mxu0 0.0
  %252 = vmatpush1.msra.mxu0 0.0
  %253 = vmatprep.subr.mxu0 0.0
  %254 = vmatpush1.msra.mxu0 0.0
  %255 = vmatprep.subr.mxu0 0.0
  %256 = vmatpush1.msra.mxu0 0.0
  %257 = vmatprep.subr.mxu0 0.0
  %258 = vmatpush1.msra.mxu0 0.0
  %259 = vmatprep.subr.mxu0 0.0
  %260 = vmatpush1.msra.mxu0 0.0
  %261 = vmatprep.subr.mxu0 0.0
  %262 = vmatpush1.msra.mxu0 0.0
  %263 = vmatprep.subr.mxu0 0.0
  %264 = vmatpush1.msra.mxu0 0.0
  %265 = vmatprep.subr.mxu0 0.0
  %266 = vmatpush1.msra.mxu0 0.0
  %267 = vmatprep.subr.mxu0 0.0
  %268 = vmatpush1.msra.mxu0 0.0
  %269 = vmatprep.subr.mxu0 0.0
  %270 = vmatpush1.msra.mxu0 0.0
  %271 = vmatprep.subr.mxu0 0.0
  %272 = vmatpush1.msra.mxu0 0.0
  %273 = vmatprep.mubr.f32.mxu0 0.0
  %274 = vmatmul.mubr.f32.gmra.mrb[0].mxu0 %v208
  %v275 = vpop.f32.mrb[0].mxu0
  %v276 = vadd.f32 %v201, %v275
  %v277 = vpop.f32.mrb[0].mxu0
  %278 = vdwg.mxu0
  %v280 = vcombine.high %v276, %v276
  %v282 = vunpack.c.l.s4 1966171168
  %v283 = vunpack.c.0.s8 %v282
  %v284 = vlaneseq
  %v285 = vshrl.u32 %v284, 7
  %v286 = vsub.s32 %v283, %v285
  %v287 = vrot.slane %v276, %v286
  %v289 = vunpack.c.l.s4 1966171168
  %v290 = vunpack.c.0.s8 %v289
  %v291 = vlaneseq
  %v292 = vshrl.u32 %v291, 7
  %v293 = vsub.s32 %v290, %v292
  %v294 = vrot.slane %v280, %v293
  %v295 = vcombine.high %v287, %v287
  %v296 = vcombine.high %v294, %v294
  %v298 = vunpack.c.l.s4 1966171168
  %v299 = vunpack.c.0.s8 %v298
  %v300 = vlaneseq
  %v301 = vshrl.u32 %v300, 7
  %v302 = vsub.s32 %v299, %v301
  %v303 = vrot.slane %v287, %v302
  %v305 = vunpack.c.l.s4 1966171168
  %v306 = vunpack.c.0.s8 %v305
  %v307 = vlaneseq
  %v308 = vshrl.u32 %v307, 7
  %v309 = vsub.s32 %v306, %v308
  %v310 = vrot.slane %v294, %v309
  %v312 = vunpack.c.l.s4 1966171168
  %v313 = vunpack.c.0.s8 %v312
  %v314 = vlaneseq
  %v315 = vshrl.u32 %v314, 7
  %v316 = vsub.s32 %v313, %v315
  %v317 = vrot.slane %v295, %v316
  %v319 = vunpack.c.l.s4 1966171168
  %v320 = vunpack.c.0.s8 %v319
  %v321 = vlaneseq
  %v322 = vshrl.u32 %v321, 7
  %v323 = vsub.s32 %v320, %v322
  %v324 = vrot.slane %v296, %v323
  %v325 = vcombine.high %v303, %v303
  %v326 = vcombine.high %v310, %v310
  %v327 = vcombine.high %v317, %v317
  %v328 = vcombine.high %v324, %v324
  %337 = vst [vmem:[%s5] sm:$0x1] %v303
  %338 = vst [vmem:[%s5 + $0x8] sm:$0x1] %v317
  %339 = vst [vmem:[%s5 + $0x10] sm:$0x1] %v325
  %340 = vst [vmem:[%s5 + $0x18] sm:$0x1] %v327
  %341 = vst [vmem:[%s5 + $0x20] sm:$0x1] %v310
  %342 = vst [vmem:[%s5 + $0x28] sm:$0x1] %v324
  %343 = vst [vmem:[%s5 + $0x30] sm:$0x1] %v326
  %344 = vst [vmem:[%s5 + $0x38] sm:$0x1] %v328
  %s345 = scalar_lea.vmem [#allocation2], 1
  %v346 = vld [vmem:[%s345] ss:$8 sm:$0xf]
  %v347 = vld [vmem:[%s345] ss:$8 sm:$0xf0]
  %v348 = vor.u32 %v346, %v347
  %v349 = vadd.f32 %v348, %v276
  %v350 = vtanh.pop %v349
  %351 = vmatprep.subr.mxu0 0.0
  %352 = vmatpush1.msra.mxu0 %v180
  %353 = vmatprep.subr.mxu0 0.0
  %354 = vmatpush1.msra.mxu0 %v181
  %355 = vmatprep.subr.mxu0 0.0
  %356 = vmatpush1.msra.mxu0 %v182
  %357 = vmatprep.subr.mxu0 0.0
  %358 = vmatpush1.msra.mxu0 %v183
  %359 = vmatprep.subr.mxu0 0.0
  %360 = vmatpush1.msra.mxu0 %v184
  %361 = vmatprep.subr.mxu0 0.0
  %362 = vmatpush1.msra.mxu0 %v185
  %363 = vmatprep.subr.mxu0 0.0
  %364 = vmatpush1.msra.mxu0 %v186
  %365 = vmatprep.subr.mxu0 0.0
  %366 = vmatpush1.msra.mxu0 %v187
  %367 = vmatprep.subr.mxu0 0.0
  %368 = vmatpush1.msra.mxu0 %v188
  %369 = vmatprep.subr.mxu0 0.0
  %370 = vmatpush1.msra.mxu0 %v189
  %371 = vmatprep.subr.mxu0 0.0
  %372 = vmatpush1.msra.mxu0 %v190
  %373 = vmatprep.subr.mxu0 0.0
  %374 = vmatpush1.msra.mxu0 %v191
  %375 = vmatprep.subr.mxu0 0.0
  %376 = vmatpush1.msra.mxu0 %v192
  %377 = vmatprep.subr.mxu0 0.0
  %378 = vmatpush1.msra.mxu0 %v193
  %379 = vmatprep.subr.mxu0 0.0
  %380 = vmatpush1.msra.mxu0 %v194
  %381 = vmatprep.subr.mxu0 0.0
  %382 = vmatpush1.msra.mxu0 %v195
  %383 = vmatprep.subr.mxu0 0.0
  %384 = vmatpush1.msra.mxu0 0.0
  %385 = vmatprep.subr.mxu0 0.0
  %386 = vmatpush1.msra.mxu0 0.0
  %387 = vmatprep.subr.mxu0 0.0
  %388 = vmatpush1.msra.mxu0 0.0
  %389 = vmatprep.subr.mxu0 0.0
  %390 = vmatpush1.msra.mxu0 0.0
  %391 = vmatprep.subr.mxu0 0.0
  %392 = vmatpush1.msra.mxu0 0.0
  %393 = vmatprep.subr.mxu0 0.0
  %394 = vmatpush1.msra.mxu0 0.0
  %395 = vmatprep.subr.mxu0 0.0
  %396 = vmatpush1.msra.mxu0 0.0
  %397 = vmatprep.subr.mxu0 0.0
  %398 = vmatpush1.msra.mxu0 0.0
  %399 = vmatprep.subr.mxu0 0.0
  %400 = vmatpush1.msra.mxu0 0.0
  %401 = vmatprep.subr.mxu0 0.0
  %402 = vmatpush1.msra.mxu0 0.0
  %403 = vmatprep.subr.mxu0 0.0
  %404 = vmatpush1.msra.mxu0 0.0
  %405 = vmatprep.subr.mxu0 0.0
  %406 = vmatpush1.msra.mxu0 0.0
  %407 = vmatprep.subr.mxu0 0.0
  %408 = vmatpush1.msra.mxu0 0.0
  %409 = vmatprep.subr.mxu0 0.0
  %410 = vmatpush1.msra.mxu0 0.0
  %411 = vmatprep.subr.mxu0 0.0
  %412 = vmatpush1.msra.mxu0 0.0
  %413 = vmatprep.subr.mxu0 0.0
  %414 = vmatpush1.msra.mxu0 0.0
  %415 = vmatprep.mubr.f32.mxu0 0.0
  %416 = vmatmul.mubr.f32.gmra.mrb[0].mxu0 %v350
  %v417 = vpop.f32.mrb[0].mxu0
  %v418 = vadd.f32 %v201, %v417
  %v419 = vpop.f32.mrb[0].mxu0
  %420 = vdwg.mxu0
  %v422 = vcombine.high %v418, %v418
  %v424 = vunpack.c.l.s4 1966171168
  %v425 = vunpack.c.0.s8 %v424
  %v426 = vlaneseq
  %v427 = vshrl.u32 %v426, 7
  %v428 = vsub.s32 %v425, %v427
  %v429 = vrot.slane %v418, %v428
  %v431 = vunpack.c.l.s4 1966171168
  %v432 = vunpack.c.0.s8 %v431
  %v433 = vlaneseq
  %v434 = vshrl.u32 %v433, 7
  %v435 = vsub.s32 %v432, %v434
  %v436 = vrot.slane %v422, %v435
  %v437 = vcombine.high %v429, %v429
  %v438 = vcombine.high %v436, %v436
  %v440 = vunpack.c.l.s4 1966171168
  %v441 = vunpack.c.0.s8 %v440
  %v442 = vlaneseq
  %v443 = vshrl.u32 %v442, 7
  %v444 = vsub.s32 %v441, %v443
  %v445 = vrot.slane %v429, %v444
  %v447 = vunpack.c.l.s4 1966171168
  %v448 = vunpack.c.0.s8 %v447
  %v449 = vlaneseq
  %v450 = vshrl.u32 %v449, 7
  %v451 = vsub.s32 %v448, %v450
  %v452 = vrot.slane %v436, %v451
  %v454 = vunpack.c.l.s4 1966171168
  %v455 = vunpack.c.0.s8 %v454
  %v456 = vlaneseq
  %v457 = vshrl.u32 %v456, 7
  %v458 = vsub.s32 %v455, %v457
  %v459 = vrot.slane %v437, %v458
  %v461 = vunpack.c.l.s4 1966171168
  %v462 = vunpack.c.0.s8 %v461
  %v463 = vlaneseq
  %v464 = vshrl.u32 %v463, 7
  %v465 = vsub.s32 %v462, %v464
  %v466 = vrot.slane %v438, %v465
  %v467 = vcombine.high %v445, %v445
  %v468 = vcombine.high %v452, %v452
  %v469 = vcombine.high %v459, %v459
  %v470 = vcombine.high %v466, %v466
  %479 = vst [vmem:[%s5 + $0x1] sm:$0x1] %v445
  %480 = vst [vmem:[%s5 + $0x9] sm:$0x1] %v459
  %481 = vst [vmem:[%s5 + $0x11] sm:$0x1] %v467
  %482 = vst [vmem:[%s5 + $0x19] sm:$0x1] %v469
  %483 = vst [vmem:[%s5 + $0x21] sm:$0x1] %v452
  %484 = vst [vmem:[%s5 + $0x29] sm:$0x1] %v466
  %485 = vst [vmem:[%s5 + $0x31] sm:$0x1] %v468
  %486 = vst [vmem:[%s5 + $0x39] sm:$0x1] %v470
  %s487 = scalar_lea.vmem [#allocation2], 2
  %v488 = vld [vmem:[%s487] ss:$8 sm:$0xf]
  %v489 = vld [vmem:[%s487] ss:$8 sm:$0xf0]
  %v490 = vor.u32 %v488, %v489
  %v491 = vadd.f32 %v490, %v418
  %v492 = vtanh.pop %v491
  %493 = vmatprep.subr.mxu0 0.0
  %494 = vmatpush1.msra.mxu0 %v180
  %495 = vmatprep.subr.mxu0 0.0
  %496 = vmatpush1.msra.mxu0 %v181
  %497 = vmatprep.subr.mxu0 0.0
  %498 = vmatpush1.msra.mxu0 %v182
  %499 = vmatprep.subr.mxu0 0.0
  %500 = vmatpush1.msra.mxu0 %v183
  %501 = vmatprep.subr.mxu0 0.0
  %502 = vmatpush1.msra.mxu0 %v184
  %503 = vmatprep.subr.mxu0 0.0
  %504 = vmatpush1.msra.mxu0 %v185
  %505 = vmatprep.subr.mxu0 0.0
  %506 = vmatpush1.msra.mxu0 %v186
  %507 = vmatprep.subr.mxu0 0.0
  %508 = vmatpush1.msra.mxu0 %v187
  %509 = vmatprep.subr.mxu0 0.0
  %510 = vmatpush1.msra.mxu0 %v188
  %511 = vmatprep.subr.mxu0 0.0
  %512 = vmatpush1.msra.mxu0 %v189
  %513 = vmatprep.subr.mxu0 0.0
  %514 = vmatpush1.msra.mxu0 %v190
  %515 = vmatprep.subr.mxu0 0.0
  %516 = vmatpush1.msra.mxu0 %v191
  %517 = vmatprep.subr.mxu0 0.0
  %518 = vmatpush1.msra.mxu0 %v192
  %519 = vmatprep.subr.mxu0 0.0
  %520 = vmatpush1.msra.mxu0 %v193
  %521 = vmatprep.subr.mxu0 0.0
  %522 = vmatpush1.msra.mxu0 %v194
  %523 = vmatprep.subr.mxu0 0.0
  %524 = vmatpush1.msra.mxu0 %v195
  %525 = vmatprep.subr.mxu0 0.0
  %526 = vmatpush1.msra.mxu0 0.0
  %527 = vmatprep.subr.mxu0 0.0
  %528 = vmatpush1.msra.mxu0 0.0
  %529 = vmatprep.subr.mxu0 0.0
  %530 = vmatpush1.msra.mxu0 0.0
  %531 = vmatprep.subr.mxu0 0.0
  %532 = vmatpush1.msra.mxu0 0.0
  %533 = vmatprep.subr.mxu0 0.0
  %534 = vmatpush1.msra.mxu0 0.0
  %535 = vmatprep.subr.mxu0 0.0
  %536 = vmatpush1.msra.mxu0 0.0
  %537 = vmatprep.subr.mxu0 0.0
  %538 = vmatpush1.msra.mxu0 0.0
  %539 = vmatprep.subr.mxu0 0.0
  %540 = vmatpush1.msra.mxu0 0.0
  %541 = vmatprep.subr.mxu0 0.0
  %542 = vmatpush1.msra.mxu0 0.0
  %543 = vmatprep.subr.mxu0 0.0
  %544 = vmatpush1.msra.mxu0 0.0
  %545 = vmatprep.subr.mxu0 0.0
  %546 = vmatpush1.msra.mxu0 0.0
  %547 = vmatprep.subr.mxu0 0.0
  %548 = vmatpush1.msra.mxu0 0.0
  %549 = vmatprep.subr.mxu0 0.0
  %550 = vmatpush1.msra.mxu0 0.0
  %551 = vmatprep.subr.mxu0 0.0
  %552 = vmatpush1.msra.mxu0 0.0
  %553 = vmatprep.subr.mxu0 0.0
  %554 = vmatpush1.msra.mxu0 0.0
  %555 = vmatprep.subr.mxu0 0.0
  %556 = vmatpush1.msra.mxu0 0.0
  %557 = vmatprep.mubr.f32.mxu0 0.0
  %558 = vmatmul.mubr.f32.gmra.mrb[0].mxu0 %v492
  %v559 = vpop.f32.mrb[0].mxu0
  %v560 = vadd.f32 %v201, %v559
  %v561 = vpop.f32.mrb[0].mxu0
  %562 = vdwg.mxu0
  %v564 = vcombine.high %v560, %v560
  %v566 = vunpack.c.l.s4 1966171168
  %v567 = vunpack.c.0.s8 %v566
  %v568 = vlaneseq
  %v569 = vshrl.u32 %v568, 7
  %v570 = vsub.s32 %v567, %v569
  %v571 = vrot.slane %v560, %v570
  %v573 = vunpack.c.l.s4 1966171168
  %v574 = vunpack.c.0.s8 %v573
  %v575 = vlaneseq
  %v576 = vshrl.u32 %v575, 7
  %v577 = vsub.s32 %v574, %v576
  %v578 = vrot.slane %v564, %v577
  %v579 = vcombine.high %v571, %v571
  %v580 = vcombine.high %v578, %v578
  %v582 = vunpack.c.l.s4 1966171168
  %v583 = vunpack.c.0.s8 %v582
  %v584 = vlaneseq
  %v585 = vshrl.u32 %v584, 7
  %v586 = vsub.s32 %v583, %v585
  %v587 = vrot.slane %v571, %v586
  %v589 = vunpack.c.l.s4 1966171168
  %v590 = vunpack.c.0.s8 %v589
  %v591 = vlaneseq
  %v592 = vshrl.u32 %v591, 7
  %v593 = vsub.s32 %v590, %v592
  %v594 = vrot.slane %v578, %v593
  %v596 = vunpack.c.l.s4 1966171168
  %v597 = vunpack.c.0.s8 %v596
  %v598 = vlaneseq
  %v599 = vshrl.u32 %v598, 7
  %v600 = vsub.s32 %v597, %v599
  %v601 = vrot.slane %v579, %v600
  %v603 = vunpack.c.l.s4 1966171168
  %v604 = vunpack.c.0.s8 %v603
  %v605 = vlaneseq
  %v606 = vshrl.u32 %v605, 7
  %v607 = vsub.s32 %v604, %v606
  %v608 = vrot.slane %v580, %v607
  %v609 = vcombine.high %v587, %v587
  %v610 = vcombine.high %v594, %v594
  %v611 = vcombine.high %v601, %v601
  %v612 = vcombine.high %v608, %v608
  %621 = vst [vmem:[%s5 + $0x2] sm:$0x1] %v587
  %622 = vst [vmem:[%s5 + $0xa] sm:$0x1] %v601
  %623 = vst [vmem:[%s5 + $0x12] sm:$0x1] %v609
  %624 = vst [vmem:[%s5 + $0x1a] sm:$0x1] %v611
  %625 = vst [vmem:[%s5 + $0x22] sm:$0x1] %v594
  %626 = vst [vmem:[%s5 + $0x2a] sm:$0x1] %v608
  %627 = vst [vmem:[%s5 + $0x32] sm:$0x1] %v610
  %628 = vst [vmem:[%s5 + $0x3a] sm:$0x1] %v612
  %s629 = scalar_lea.vmem [#allocation2], 3
  %v630 = vld [vmem:[%s629] ss:$8 sm:$0xf]
  %v631 = vld [vmem:[%s629] ss:$8 sm:$0xf0]
  %v632 = vor.u32 %v630, %v631
  %v633 = vadd.f32 %v632, %v560
  %v634 = vtanh.pop %v633
  %635 = vmatprep.subr.mxu0 0.0
  %636 = vmatpush1.msra.mxu0 %v180
  %637 = vmatprep.subr.mxu0 0.0
  %638 = vmatpush1.msra.mxu0 %v181
  %639 = vmatprep.subr.mxu0 0.0
  %640 = vmatpush1.msra.mxu0 %v182
  %641 = vmatprep.subr.mxu0 0.0
  %642 = vmatpush1.msra.mxu0 %v183
  %643 = vmatprep.subr.mxu0 0.0
  %644 = vmatpush1.msra.mxu0 %v184
  %645 = vmatprep.subr.mxu0 0.0
  %646 = vmatpush1.msra.mxu0 %v185
  %647 = vmatprep.subr.mxu0 0.0
  %648 = vmatpush1.msra.mxu0 %v186
  %649 = vmatprep.subr.mxu0 0.0
  %650 = vmatpush1.msra.mxu0 %v187
  %651 = vmatprep.subr.mxu0 0.0
  %652 = vmatpush1.msra.mxu0 %v188
  %653 = vmatprep.subr.mxu0 0.0
  %654 = vmatpush1.msra.mxu0 %v189
  %655 = vmatprep.subr.mxu0 0.0
  %656 = vmatpush1.msra.mxu0 %v190
  %657 = vmatprep.subr.mxu0 0.0
  %658 = vmatpush1.msra.mxu0 %v191
  %659 = vmatprep.subr.mxu0 0.0
  %660 = vmatpush1.msra.mxu0 %v192
  %661 = vmatprep.subr.mxu0 0.0
  %662 = vmatpush1.msra.mxu0 %v193
  %663 = vmatprep.subr.mxu0 0.0
  %664 = vmatpush1.msra.mxu0 %v194
  %665 = vmatprep.subr.mxu0 0.0
  %666 = vmatpush1.msra.mxu0 %v195
  %667 = vmatprep.subr.mxu0 0.0
  %668 = vmatpush1.msra.mxu0 0.0
  %669 = vmatprep.subr.mxu0 0.0
  %670 = vmatpush1.msra.mxu0 0.0
  %671 = vmatprep.subr.mxu0 0.0
  %672 = vmatpush1.msra.mxu0 0.0
  %673 = vmatprep.subr.mxu0 0.0
  %674 = vmatpush1.msra.mxu0 0.0
  %675 = vmatprep.subr.mxu0 0.0
  %676 = vmatpush1.msra.mxu0 0.0
  %677 = vmatprep.subr.mxu0 0.0
  %678 = vmatpush1.msra.mxu0 0.0
  %679 = vmatprep.subr.mxu0 0.0
  %680 = vmatpush1.msra.mxu0 0.0
  %681 = vmatprep.subr.mxu0 0.0
  %682 = vmatpush1.msra.mxu0 0.0
  %683 = vmatprep.subr.mxu0 0.0
  %684 = vmatpush1.msra.mxu0 0.0
  %685 = vmatprep.subr.mxu0 0.0
  %686 = vmatpush1.msra.mxu0 0.0
  %687 = vmatprep.subr.mxu0 0.0
  %688 = vmatpush1.msra.mxu0 0.0
  %689 = vmatprep.subr.mxu0 0.0
  %690 = vmatpush1.msra.mxu0 0.0
  %691 = vmatprep.subr.mxu0 0.0
  %692 = vmatpush1.msra.mxu0 0.0
  %693 = vmatprep.subr.mxu0 0.0
  %694 = vmatpush1.msra.mxu0 0.0
  %695 = vmatprep.subr.mxu0 0.0
  %696 = vmatpush1.msra.mxu0 0.0
  %697 = vmatprep.subr.mxu0 0.0
  %698 = vmatpush1.msra.mxu0 0.0
  %699 = vmatprep.mubr.f32.mxu0 0.0
  %700 = vmatmul.mubr.f32.gmra.mrb[0].mxu0 %v634
  %v701 = vpop.f32.mrb[0].mxu0
  %v702 = vadd.f32 %v201, %v701
  %v703 = vpop.f32.mrb[0].mxu0
  %704 = vdwg.mxu0
  %v706 = vcombine.high %v702, %v702
  %v708 = vunpack.c.l.s4 1966171168
  %v709 = vunpack.c.0.s8 %v708
  %v710 = vlaneseq
  %v711 = vshrl.u32 %v710, 7
  %v712 = vsub.s32 %v709, %v711
  %v713 = vrot.slane %v702, %v712
  %v715 = vunpack.c.l.s4 1966171168
  %v716 = vunpack.c.0.s8 %v715
  %v717 = vlaneseq
  %v718 = vshrl.u32 %v717, 7
  %v719 = vsub.s32 %v716, %v718
  %v720 = vrot.slane %v706, %v719
  %v721 = vcombine.high %v713, %v713
  %v722 = vcombine.high %v720, %v720
  %v724 = vunpack.c.l.s4 1966171168
  %v725 = vunpack.c.0.s8 %v724
  %v726 = vlaneseq
  %v727 = vshrl.u32 %v726, 7
  %v728 = vsub.s32 %v725, %v727
  %v729 = vrot.slane %v713, %v728
  %v731 = vunpack.c.l.s4 1966171168
  %v732 = vunpack.c.0.s8 %v731
  %v733 = vlaneseq
  %v734 = vshrl.u32 %v733, 7
  %v735 = vsub.s32 %v732, %v734
  %v736 = vrot.slane %v720, %v735
  %v738 = vunpack.c.l.s4 1966171168
  %v739 = vunpack.c.0.s8 %v738
  %v740 = vlaneseq
  %v741 = vshrl.u32 %v740, 7
  %v742 = vsub.s32 %v739, %v741
  %v743 = vrot.slane %v721, %v742
  %v745 = vunpack.c.l.s4 1966171168
  %v746 = vunpack.c.0.s8 %v745
  %v747 = vlaneseq
  %v748 = vshrl.u32 %v747, 7
  %v749 = vsub.s32 %v746, %v748
  %v750 = vrot.slane %v722, %v749
  %v751 = vcombine.high %v729, %v729
  %v752 = vcombine.high %v736, %v736
  %v753 = vcombine.high %v743, %v743
  %v754 = vcombine.high %v750, %v750
  %763 = vst [vmem:[%s5 + $0x3] sm:$0x1] %v729
  %764 = vst [vmem:[%s5 + $0xb] sm:$0x1] %v743
  %765 = vst [vmem:[%s5 + $0x13] sm:$0x1] %v751
  %766 = vst [vmem:[%s5 + $0x1b] sm:$0x1] %v753
  %767 = vst [vmem:[%s5 + $0x23] sm:$0x1] %v736
  %768 = vst [vmem:[%s5 + $0x2b] sm:$0x1] %v750
  %769 = vst [vmem:[%s5 + $0x33] sm:$0x1] %v752
  %770 = vst [vmem:[%s5 + $0x3b] sm:$0x1] %v754
  %s771 = scalar_lea.vmem [#allocation2], 4
  %v772 = vld [vmem:[%s771] ss:$8 sm:$0xf]
  %v773 = vld [vmem:[%s771] ss:$8 sm:$0xf0]
  %v774 = vor.u32 %v772, %v773
  %v775 = vadd.f32 %v774, %v702
  %v776 = vtanh.pop %v775
  %777 = vmatprep.subr.mxu0 0.0
  %778 = vmatpush1.msra.mxu0 %v180
  %779 = vmatprep.subr.mxu0 0.0
  %780 = vmatpush1.msra.mxu0 %v181
  %781 = vmatprep.subr.mxu0 0.0
  %782 = vmatpush1.msra.mxu0 %v182
  %783 = vmatprep.subr.mxu0 0.0
  %784 = vmatpush1.msra.mxu0 %v183
  %785 = vmatprep.subr.mxu0 0.0
  %786 = vmatpush1.msra.mxu0 %v184
  %787 = vmatprep.subr.mxu0 0.0
  %788 = vmatpush1.msra.mxu0 %v185
  %789 = vmatprep.subr.mxu0 0.0
  %790 = vmatpush1.msra.mxu0 %v186
  %791 = vmatprep.subr.mxu0 0.0
  %792 = vmatpush1.msra.mxu0 %v187
  %793 = vmatprep.subr.mxu0 0.0
  %794 = vmatpush1.msra.mxu0 %v188
  %795 = vmatprep.subr.mxu0 0.0
  %796 = vmatpush1.msra.mxu0 %v189
  %797 = vmatprep.subr.mxu0 0.0
  %798 = vmatpush1.msra.mxu0 %v190
  %799 = vmatprep.subr.mxu0 0.0
  %800 = vmatpush1.msra.mxu0 %v191
  %801 = vmatprep.subr.mxu0 0.0
  %802 = vmatpush1.msra.mxu0 %v192
  %803 = vmatprep.subr.mxu0 0.0
  %804 = vmatpush1.msra.mxu0 %v193
  %805 = vmatprep.subr.mxu0 0.0
  %806 = vmatpush1.msra.mxu0 %v194
  %807 = vmatprep.subr.mxu0 0.0
  %808 = vmatpush1.msra.mxu0 %v195
  %809 = vmatprep.subr.mxu0 0.0
  %810 = vmatpush1.msra.mxu0 0.0
  %811 = vmatprep.subr.mxu0 0.0
  %812 = vmatpush1.msra.mxu0 0.0
  %813 = vmatprep.subr.mxu0 0.0
  %814 = vmatpush1.msra.mxu0 0.0
  %815 = vmatprep.subr.mxu0 0.0
  %816 = vmatpush1.msra.mxu0 0.0
  %817 = vmatprep.subr.mxu0 0.0
  %818 = vmatpush1.msra.mxu0 0.0
  %819 = vmatprep.subr.mxu0 0.0
  %820 = vmatpush1.msra.mxu0 0.0
  %821 = vmatprep.subr.mxu0 0.0
  %822 = vmatpush1.msra.mxu0 0.0
  %823 = vmatprep.subr.mxu0 0.0
  %824 = vmatpush1.msra.mxu0 0.0
  %825 = vmatprep.subr.mxu0 0.0
  %826 = vmatpush1.msra.mxu0 0.0
  %827 = vmatprep.subr.mxu0 0.0
  %828 = vmatpush1.msra.mxu0 0.0
  %829 = vmatprep.subr.mxu0 0.0
  %830 = vmatpush1.msra.mxu0 0.0
  %831 = vmatprep.subr.mxu0 0.0
  %832 = vmatpush1.msra.mxu0 0.0
  %833 = vmatprep.subr.mxu0 0.0
  %834 = vmatpush1.msra.mxu0 0.0
  %835 = vmatprep.subr.mxu0 0.0
  %836 = vmatpush1.msra.mxu0 0.0
  %837 = vmatprep.subr.mxu0 0.0
  %838 = vmatpush1.msra.mxu0 0.0
  %839 = vmatprep.subr.mxu0 0.0
  %840 = vmatpush1.msra.mxu0 0.0
  %841 = vmatprep.mubr.f32.mxu0 0.0
  %842 = vmatmul.mubr.f32.gmra.mrb[0].mxu0 %v776
  %v843 = vpop.f32.mrb[0].mxu0
  %v844 = vadd.f32 %v201, %v843
  %v845 = vpop.f32.mrb[0].mxu0
  %846 = vdwg.mxu0
  %v848 = vcombine.high %v844, %v844
  %v850 = vunpack.c.l.s4 1966171168
  %v851 = vunpack.c.0.s8 %v850
  %v852 = vlaneseq
  %v853 = vshrl.u32 %v852, 7
  %v854 = vsub.s32 %v851, %v853
  %v855 = vrot.slane %v844, %v854
  %v857 = vunpack.c.l.s4 1966171168
  %v858 = vunpack.c.0.s8 %v857
  %v859 = vlaneseq
  %v860 = vshrl.u32 %v859, 7
  %v861 = vsub.s32 %v858, %v860
  %v862 = vrot.slane %v848, %v861
  %v863 = vcombine.high %v855, %v855
  %v864 = vcombine.high %v862, %v862
  %v866 = vunpack.c.l.s4 1966171168
  %v867 = vunpack.c.0.s8 %v866
  %v868 = vlaneseq
  %v869 = vshrl.u32 %v868, 7
  %v870 = vsub.s32 %v867, %v869
  %v871 = vrot.slane %v855, %v870
  %v873 = vunpack.c.l.s4 1966171168
  %v874 = vunpack.c.0.s8 %v873
  %v875 = vlaneseq
  %v876 = vshrl.u32 %v875, 7
  %v877 = vsub.s32 %v874, %v876
  %v878 = vrot.slane %v862, %v877
  %v880 = vunpack.c.l.s4 1966171168
  %v881 = vunpack.c.0.s8 %v880
  %v882 = vlaneseq
  %v883 = vshrl.u32 %v882, 7
  %v884 = vsub.s32 %v881, %v883
  %v885 = vrot.slane %v863, %v884
  %v887 = vunpack.c.l.s4 1966171168
  %v888 = vunpack.c.0.s8 %v887
  %v889 = vlaneseq
  %v890 = vshrl.u32 %v889, 7
  %v891 = vsub.s32 %v888, %v890
  %v892 = vrot.slane %v864, %v891
  %v893 = vcombine.high %v871, %v871
  %v894 = vcombine.high %v878, %v878
  %v895 = vcombine.high %v885, %v885
  %v896 = vcombine.high %v892, %v892
  %905 = vst [vmem:[%s5 + $0x4] sm:$0x1] %v871
  %906 = vst [vmem:[%s5 + $0xc] sm:$0x1] %v885
  %907 = vst [vmem:[%s5 + $0x14] sm:$0x1] %v893
  %908 = vst [vmem:[%s5 + $0x1c] sm:$0x1] %v895
  %909 = vst [vmem:[%s5 + $0x24] sm:$0x1] %v878
  %910 = vst [vmem:[%s5 + $0x2c] sm:$0x1] %v892
  %911 = vst [vmem:[%s5 + $0x34] sm:$0x1] %v894
  %912 = vst [vmem:[%s5 + $0x3c] sm:$0x1] %v896
  %s913 = scalar_lea.vmem [#allocation2], 5
  %v914 = vld [vmem:[%s913] ss:$8 sm:$0xf]
  %v915 = vld [vmem:[%s913] ss:$8 sm:$0xf0]
  %v916 = vor.u32 %v914, %v915
  %v917 = vadd.f32 %v916, %v844
  %v918 = vtanh.pop %v917
  %919 = vmatprep.subr.mxu0 0.0
  %920 = vmatpush1.msra.mxu0 %v180
  %921 = vmatprep.subr.mxu0 0.0
  %922 = vmatpush1.msra.mxu0 %v181
  %923 = vmatprep.subr.mxu0 0.0
  %924 = vmatpush1.msra.mxu0 %v182
  %925 = vmatprep.subr.mxu0 0.0
  %926 = vmatpush1.msra.mxu0 %v183
  %927 = vmatprep.subr.mxu0 0.0
  %928 = vmatpush1.msra.mxu0 %v184
  %929 = vmatprep.subr.mxu0 0.0
  %930 = vmatpush1.msra.mxu0 %v185
  %931 = vmatprep.subr.mxu0 0.0
  %932 = vmatpush1.msra.mxu0 %v186
  %933 = vmatprep.subr.mxu0 0.0
  %934 = vmatpush1.msra.mxu0 %v187
  %935 = vmatprep.subr.mxu0 0.0
  %936 = vmatpush1.msra.mxu0 %v188
  %937 = vmatprep.subr.mxu0 0.0
  %938 = vmatpush1.msra.mxu0 %v189
  %939 = vmatprep.subr.mxu0 0.0
  %940 = vmatpush1.msra.mxu0 %v190
  %941 = vmatprep.subr.mxu0 0.0
  %942 = vmatpush1.msra.mxu0 %v191
  %943 = vmatprep.subr.mxu0 0.0
  %944 = vmatpush1.msra.mxu0 %v192
  %945 = vmatprep.subr.mxu0 0.0
  %946 = vmatpush1.msra.mxu0 %v193
  %947 = vmatprep.subr.mxu0 0.0
  %948 = vmatpush1.msra.mxu0 %v194
  %949 = vmatprep.subr.mxu0 0.0
  %950 = vmatpush1.msra.mxu0 %v195
  %951 = vmatprep.subr.mxu0 0.0
  %952 = vmatpush1.msra.mxu0 0.0
  %953 = vmatprep.subr.mxu0 0.0
  %954 = vmatpush1.msra.mxu0 0.0
  %955 = vmatprep.subr.mxu0 0.0
  %956 = vmatpush1.msra.mxu0 0.0
  %957 = vmatprep.subr.mxu0 0.0
  %958 = vmatpush1.msra.mxu0 0.0
  %959 = vmatprep.subr.mxu0 0.0
  %960 = vmatpush1.msra.mxu0 0.0
  %961 = vmatprep.subr.mxu0 0.0
  %962 = vmatpush1.msra.mxu0 0.0
  %963 = vmatprep.subr.mxu0 0.0
  %964 = vmatpush1.msra.mxu0 0.0
  %965 = vmatprep.subr.mxu0 0.0
  %966 = vmatpush1.msra.mxu0 0.0
  %967 = vmatprep.subr.mxu0 0.0
  %968 = vmatpush1.msra.mxu0 0.0
  %969 = vmatprep.subr.mxu0 0.0
  %970 = vmatpush1.msra.mxu0 0.0
  %971 = vmatprep.subr.mxu0 0.0
  %972 = vmatpush1.msra.mxu0 0.0
  %973 = vmatprep.subr.mxu0 0.0
  %974 = vmatpush1.msra.mxu0 0.0
  %975 = vmatprep.subr.mxu0 0.0
  %976 = vmatpush1.msra.mxu0 0.0
  %977 = vmatprep.subr.mxu0 0.0
  %978 = vmatpush1.msra.mxu0 0.0
  %979 = vmatprep.subr.mxu0 0.0
  %980 = vmatpush1.msra.mxu0 0.0
  %981 = vmatprep.subr.mxu0 0.0
  %982 = vmatpush1.msra.mxu0 0.0
  %983 = vmatprep.mubr.f32.mxu0 0.0
  %984 = vmatmul.mubr.f32.gmra.mrb[0].mxu0 %v918
  %v985 = vpop.f32.mrb[0].mxu0
  %v986 = vadd.f32 %v201, %v985
  %v987 = vpop.f32.mrb[0].mxu0
  %988 = vdwg.mxu0
  %v990 = vcombine.high %v986, %v986
  %v992 = vunpack.c.l.s4 1966171168
  %v993 = vunpack.c.0.s8 %v992
  %v994 = vlaneseq
  %v995 = vshrl.u32 %v994, 7
  %v996 = vsub.s32 %v993, %v995
  %v997 = vrot.slane %v986, %v996
  %v999 = vunpack.c.l.s4 1966171168
  %v1000 = vunpack.c.0.s8 %v999
  %v1001 = vlaneseq
  %v1002 = vshrl.u32 %v1001, 7
  %v1003 = vsub.s32 %v1000, %v1002
  %v1004 = vrot.slane %v990, %v1003
  %v1005 = vcombine.high %v997, %v997
  %v1006 = vcombine.high %v1004, %v1004
  %v1008 = vunpack.c.l.s4 1966171168
  %v1009 = vunpack.c.0.s8 %v1008
  %v1010 = vlaneseq
  %v1011 = vshrl.u32 %v1010, 7
  %v1012 = vsub.s32 %v1009, %v1011
  %v1013 = vrot.slane %v997, %v1012
  %v1015 = vunpack.c.l.s4 1966171168
  %v1016 = vunpack.c.0.s8 %v1015
  %v1017 = vlaneseq
  %v1018 = vshrl.u32 %v1017, 7
  %v1019 = vsub.s32 %v1016, %v1018
  %v1020 = vrot.slane %v1004, %v1019
  %v1022 = vunpack.c.l.s4 1966171168
  %v1023 = vunpack.c.0.s8 %v1022
  %v1024 = vlaneseq
  %v1025 = vshrl.u32 %v1024, 7
  %v1026 = vsub.s32 %v1023, %v1025
  %v1027 = vrot.slane %v1005, %v1026
  %v1029 = vunpack.c.l.s4 1966171168
  %v1030 = vunpack.c.0.s8 %v1029
  %v1031 = vlaneseq
  %v1032 = vshrl.u32 %v1031, 7
  %v1033 = vsub.s32 %v1030, %v1032
  %v1034 = vrot.slane %v1006, %v1033
  %v1035 = vcombine.high %v1013, %v1013
  %v1036 = vcombine.high %v1020, %v1020
  %v1037 = vcombine.high %v1027, %v1027
  %v1038 = vcombine.high %v1034, %v1034
  %1047 = vst [vmem:[%s5 + $0x5] sm:$0x1] %v1013
  %1048 = vst [vmem:[%s5 + $0xd] sm:$0x1] %v1027
  %1049 = vst [vmem:[%s5 + $0x15] sm:$0x1] %v1035
  %1050 = vst [vmem:[%s5 + $0x1d] sm:$0x1] %v1037
  %1051 = vst [vmem:[%s5 + $0x25] sm:$0x1] %v1020
  %1052 = vst [vmem:[%s5 + $0x2d] sm:$0x1] %v1034
  %1053 = vst [vmem:[%s5 + $0x35] sm:$0x1] %v1036
  %1054 = vst [vmem:[%s5 + $0x3d] sm:$0x1] %v1038
  %s1055 = scalar_lea.vmem [#allocation2], 6
  %v1056 = vld [vmem:[%s1055] ss:$8 sm:$0xf]
  %v1057 = vld [vmem:[%s1055] ss:$8 sm:$0xf0]
  %v1058 = vor.u32 %v1056, %v1057
  %v1059 = vadd.f32 %v1058, %v986
  %v1060 = vtanh.pop %v1059
  %1061 = vmatprep.subr.mxu0 0.0
  %1062 = vmatpush1.msra.mxu0 %v180
  %1063 = vmatprep.subr.mxu0 0.0
  %1064 = vmatpush1.msra.mxu0 %v181
  %1065 = vmatprep.subr.mxu0 0.0
  %1066 = vmatpush1.msra.mxu0 %v182
  %1067 = vmatprep.subr.mxu0 0.0
  %1068 = vmatpush1.msra.mxu0 %v183
  %1069 = vmatprep.subr.mxu0 0.0
  %1070 = vmatpush1.msra.mxu0 %v184
  %1071 = vmatprep.subr.mxu0 0.0
  %1072 = vmatpush1.msra.mxu0 %v185
  %1073 = vmatprep.subr.mxu0 0.0
  %1074 = vmatpush1.msra.mxu0 %v186
  %1075 = vmatprep.subr.mxu0 0.0
  %1076 = vmatpush1.msra.mxu0 %v187
  %1077 = vmatprep.subr.mxu0 0.0
  %1078 = vmatpush1.msra.mxu0 %v188
  %1079 = vmatprep.subr.mxu0 0.0
  %1080 = vmatpush1.msra.mxu0 %v189
  %1081 = vmatprep.subr.mxu0 0.0
  %1082 = vmatpush1.msra.mxu0 %v190
  %1083 = vmatprep.subr.mxu0 0.0
  %1084 = vmatpush1.msra.mxu0 %v191
  %1085 = vmatprep.subr.mxu0 0.0
  %1086 = vmatpush1.msra.mxu0 %v192
  %1087 = vmatprep.subr.mxu0 0.0
  %1088 = vmatpush1.msra.mxu0 %v193
  %1089 = vmatprep.subr.mxu0 0.0
  %1090 = vmatpush1.msra.mxu0 %v194
  %1091 = vmatprep.subr.mxu0 0.0
  %1092 = vmatpush1.msra.mxu0 %v195
  %1093 = vmatprep.subr.mxu0 0.0
  %1094 = vmatpush1.msra.mxu0 0.0
  %1095 = vmatprep.subr.mxu0 0.0
  %1096 = vmatpush1.msra.mxu0 0.0
  %1097 = vmatprep.subr.mxu0 0.0
  %1098 = vmatpush1.msra.mxu0 0.0
  %1099 = vmatprep.subr.mxu0 0.0
  %1100 = vmatpush1.msra.mxu0 0.0
  %1101 = vmatprep.subr.mxu0 0.0
  %1102 = vmatpush1.msra.mxu0 0.0
  %1103 = vmatprep.subr.mxu0 0.0
  %1104 = vmatpush1.msra.mxu0 0.0
  %1105 = vmatprep.subr.mxu0 0.0
  %1106 = vmatpush1.msra.mxu0 0.0
  %1107 = vmatprep.subr.mxu0 0.0
  %1108 = vmatpush1.msra.mxu0 0.0
  %1109 = vmatprep.subr.mxu0 0.0
  %1110 = vmatpush1.msra.mxu0 0.0
  %1111 = vmatprep.subr.mxu0 0.0
  %1112 = vmatpush1.msra.mxu0 0.0
  %1113 = vmatprep.subr.mxu0 0.0
  %1114 = vmatpush1.msra.mxu0 0.0
  %1115 = vmatprep.subr.mxu0 0.0
  %1116 = vmatpush1.msra.mxu0 0.0
  %1117 = vmatprep.subr.mxu0 0.0
  %1118 = vmatpush1.msra.mxu0 0.0
  %1119 = vmatprep.subr.mxu0 0.0
  %1120 = vmatpush1.msra.mxu0 0.0
  %1121 = vmatprep.subr.mxu0 0.0
  %1122 = vmatpush1.msra.mxu0 0.0
  %1123 = vmatprep.subr.mxu0 0.0
  %1124 = vmatpush1.msra.mxu0 0.0
  %1125 = vmatprep.mubr.f32.mxu0 0.0
  %1126 = vmatmul.mubr.f32.gmra.mrb[0].mxu0 %v1060
  %v1127 = vpop.f32.mrb[0].mxu0
  %v1128 = vadd.f32 %v201, %v1127
  %v1129 = vpop.f32.mrb[0].mxu0
  %1130 = vdwg.mxu0
  %v1132 = vcombine.high %v1128, %v1128
  %v1134 = vunpack.c.l.s4 1966171168
  %v1135 = vunpack.c.0.s8 %v1134
  %v1136 = vlaneseq
  %v1137 = vshrl.u32 %v1136, 7
  %v1138 = vsub.s32 %v1135, %v1137
  %v1139 = vrot.slane %v1128, %v1138
  %v1141 = vunpack.c.l.s4 1966171168
  %v1142 = vunpack.c.0.s8 %v1141
  %v1143 = vlaneseq
  %v1144 = vshrl.u32 %v1143, 7
  %v1145 = vsub.s32 %v1142, %v1144
  %v1146 = vrot.slane %v1132, %v1145
  %v1147 = vcombine.high %v1139, %v1139
  %v1148 = vcombine.high %v1146, %v1146
  %v1150 = vunpack.c.l.s4 1966171168
  %v1151 = vunpack.c.0.s8 %v1150
  %v1152 = vlaneseq
  %v1153 = vshrl.u32 %v1152, 7
  %v1154 = vsub.s32 %v1151, %v1153
  %v1155 = vrot.slane %v1139, %v1154
  %v1157 = vunpack.c.l.s4 1966171168
  %v1158 = vunpack.c.0.s8 %v1157
  %v1159 = vlaneseq
  %v1160 = vshrl.u32 %v1159, 7
  %v1161 = vsub.s32 %v1158, %v1160
  %v1162 = vrot.slane %v1146, %v1161
  %v1164 = vunpack.c.l.s4 1966171168
  %v1165 = vunpack.c.0.s8 %v1164
  %v1166 = vlaneseq
  %v1167 = vshrl.u32 %v1166, 7
  %v1168 = vsub.s32 %v1165, %v1167
  %v1169 = vrot.slane %v1147, %v1168
  %v1171 = vunpack.c.l.s4 1966171168
  %v1172 = vunpack.c.0.s8 %v1171
  %v1173 = vlaneseq
  %v1174 = vshrl.u32 %v1173, 7
  %v1175 = vsub.s32 %v1172, %v1174
  %v1176 = vrot.slane %v1148, %v1175
  %v1177 = vcombine.high %v1155, %v1155
  %v1178 = vcombine.high %v1162, %v1162
  %v1179 = vcombine.high %v1169, %v1169
  %v1180 = vcombine.high %v1176, %v1176
  %1189 = vst [vmem:[%s5 + $0x6] sm:$0x1] %v1155
  %1190 = vst [vmem:[%s5 + $0xe] sm:$0x1] %v1169
  %1191 = vst [vmem:[%s5 + $0x16] sm:$0x1] %v1177
  %1192 = vst [vmem:[%s5 + $0x1e] sm:$0x1] %v1179
  %1193 = vst [vmem:[%s5 + $0x26] sm:$0x1] %v1162
  %1194 = vst [vmem:[%s5 + $0x2e] sm:$0x1] %v1176
  %1195 = vst [vmem:[%s5 + $0x36] sm:$0x1] %v1178
  %1196 = vst [vmem:[%s5 + $0x3e] sm:$0x1] %v1180
  %s1197 = scalar_lea.vmem [#allocation2], 7
  %v1198 = vld [vmem:[%s1197] ss:$8 sm:$0xf]
  %v1199 = vld [vmem:[%s1197] ss:$8 sm:$0xf0]
  %v1200 = vor.u32 %v1198, %v1199
  %v1201 = vadd.f32 %v1200, %v1128
  %v1202 = vtanh.pop %v1201
  %1203 = vmatprep.subr.mxu0 0.0
  %1204 = vmatpush1.msra.mxu0 %v180
  %1205 = vmatprep.subr.mxu0 0.0
  %1206 = vmatpush1.msra.mxu0 %v181
  %1207 = vmatprep.subr.mxu0 0.0
  %1208 = vmatpush1.msra.mxu0 %v182
  %1209 = vmatprep.subr.mxu0 0.0
  %1210 = vmatpush1.msra.mxu0 %v183
  %1211 = vmatprep.subr.mxu0 0.0
  %1212 = vmatpush1.msra.mxu0 %v184
  %1213 = vmatprep.subr.mxu0 0.0
  %1214 = vmatpush1.msra.mxu0 %v185
  %1215 = vmatprep.subr.mxu0 0.0
  %1216 = vmatpush1.msra.mxu0 %v186
  %1217 = vmatprep.subr.mxu0 0.0
  %1218 = vmatpush1.msra.mxu0 %v187
  %1219 = vmatprep.subr.mxu0 0.0
  %1220 = vmatpush1.msra.mxu0 %v188
  %1221 = vmatprep.subr.mxu0 0.0
  %1222 = vmatpush1.msra.mxu0 %v189
  %1223 = vmatprep.subr.mxu0 0.0
  %1224 = vmatpush1.msra.mxu0 %v190
  %1225 = vmatprep.subr.mxu0 0.0
  %1226 = vmatpush1.msra.mxu0 %v191
  %1227 = vmatprep.subr.mxu0 0.0
  %1228 = vmatpush1.msra.mxu0 %v192
  %1229 = vmatprep.subr.mxu0 0.0
  %1230 = vmatpush1.msra.mxu0 %v193
  %1231 = vmatprep.subr.mxu0 0.0
  %1232 = vmatpush1.msra.mxu0 %v194
  %1233 = vmatprep.subr.mxu0 0.0
  %1234 = vmatpush1.msra.mxu0 %v195
  %1235 = vmatprep.subr.mxu0 0.0
  %1236 = vmatpush1.msra.mxu0 0.0
  %1237 = vmatprep.subr.mxu0 0.0
  %1238 = vmatpush1.msra.mxu0 0.0
  %1239 = vmatprep.subr.mxu0 0.0
  %1240 = vmatpush1.msra.mxu0 0.0
  %1241 = vmatprep.subr.mxu0 0.0
  %1242 = vmatpush1.msra.mxu0 0.0
  %1243 = vmatprep.subr.mxu0 0.0
  %1244 = vmatpush1.msra.mxu0 0.0
  %1245 = vmatprep.subr.mxu0 0.0
  %1246 = vmatpush1.msra.mxu0 0.0
  %1247 = vmatprep.subr.mxu0 0.0
  %1248 = vmatpush1.msra.mxu0 0.0
  %1249 = vmatprep.subr.mxu0 0.0
  %1250 = vmatpush1.msra.mxu0 0.0
  %1251 = vmatprep.subr.mxu0 0.0
  %1252 = vmatpush1.msra.mxu0 0.0
  %1253 = vmatprep.subr.mxu0 0.0
  %1254 = vmatpush1.msra.mxu0 0.0
  %1255 = vmatprep.subr.mxu0 0.0
  %1256 = vmatpush1.msra.mxu0 0.0
  %1257 = vmatprep.subr.mxu0 0.0
  %1258 = vmatpush1.msra.mxu0 0.0
  %1259 = vmatprep.subr.mxu0 0.0
  %1260 = vmatpush1.msra.mxu0 0.0
  %1261 = vmatprep.subr.mxu0 0.0
  %1262 = vmatpush1.msra.mxu0 0.0
  %1263 = vmatprep.subr.mxu0 0.0
  %1264 = vmatpush1.msra.mxu0 0.0
  %1265 = vmatprep.subr.mxu0 0.0
  %1266 = vmatpush1.msra.mxu0 0.0
  %1267 = vmatprep.mubr.f32.mxu0 0.0
  %1268 = vmatmul.mubr.f32.gmra.mrb[0].mxu0 %v1202
  %v1269 = vpop.f32.mrb[0].mxu0
  %v1270 = vadd.f32 %v201, %v1269
  %v1271 = vpop.f32.mrb[0].mxu0
  %1272 = vdwg.mxu0
  %v1274 = vcombine.high %v1270, %v1270
  %v1276 = vunpack.c.l.s4 1966171168
  %v1277 = vunpack.c.0.s8 %v1276
  %v1278 = vlaneseq
  %v1279 = vshrl.u32 %v1278, 7
  %v1280 = vsub.s32 %v1277, %v1279
  %v1281 = vrot.slane %v1270, %v1280
  %v1283 = vunpack.c.l.s4 1966171168
  %v1284 = vunpack.c.0.s8 %v1283
  %v1285 = vlaneseq
  %v1286 = vshrl.u32 %v1285, 7
  %v1287 = vsub.s32 %v1284, %v1286
  %v1288 = vrot.slane %v1274, %v1287
  %v1289 = vcombine.high %v1281, %v1281
  %v1290 = vcombine.high %v1288, %v1288
  %v1292 = vunpack.c.l.s4 1966171168
  %v1293 = vunpack.c.0.s8 %v1292
  %v1294 = vlaneseq
  %v1295 = vshrl.u32 %v1294, 7
  %v1296 = vsub.s32 %v1293, %v1295
  %v1297 = vrot.slane %v1281, %v1296
  %v1299 = vunpack.c.l.s4 1966171168
  %v1300 = vunpack.c.0.s8 %v1299
  %v1301 = vlaneseq
  %v1302 = vshrl.u32 %v1301, 7
  %v1303 = vsub.s32 %v1300, %v1302
  %v1304 = vrot.slane %v1288, %v1303
  %v1306 = vunpack.c.l.s4 1966171168
  %v1307 = vunpack.c.0.s8 %v1306
  %v1308 = vlaneseq
  %v1309 = vshrl.u32 %v1308, 7
  %v1310 = vsub.s32 %v1307, %v1309
  %v1311 = vrot.slane %v1289, %v1310
  %v1313 = vunpack.c.l.s4 1966171168
  %v1314 = vunpack.c.0.s8 %v1313
  %v1315 = vlaneseq
  %v1316 = vshrl.u32 %v1315, 7
  %v1317 = vsub.s32 %v1314, %v1316
  %v1318 = vrot.slane %v1290, %v1317
  %v1319 = vcombine.high %v1297, %v1297
  %v1320 = vcombine.high %v1304, %v1304
  %v1321 = vcombine.high %v1311, %v1311
  %v1322 = vcombine.high %v1318, %v1318
  %1331 = vst [vmem:[%s5 + $0x7] sm:$0x1] %v1297
  %1332 = vst [vmem:[%s5 + $0xf] sm:$0x1] %v1311
  %1333 = vst [vmem:[%s5 + $0x17] sm:$0x1] %v1319
  %1334 = vst [vmem:[%s5 + $0x1f] sm:$0x1] %v1321
  %1335 = vst [vmem:[%s5 + $0x27] sm:$0x1] %v1304
  %1336 = vst [vmem:[%s5 + $0x2f] sm:$0x1] %v1318
  %1337 = vst [vmem:[%s5 + $0x37] sm:$0x1] %v1320
  %1338 = vst [vmem:[%s5 + $0x3f] sm:$0x1] %v1322
  %1339 = vst [vmem:[#allocation3] sm:$0xff] %v1270
  // Predicated region
  $region26: #{rnn_forward.1} parent=0 // pred_check
    _
  $region27: #{rnn_forward.1} parent=0 // pred_check_branch
    %1341 = sbr.rel (0) target = $region29
  $region28: #{rnn_forward.1} parent=0 // pred_region
    _
  $region29: #{rnn_forward.1} parent=0 // pred_fallthru
    _
  // Predicated region
  $region30: #{rnn_forward.1} parent=0 // pred_check
    _
  $region31: #{rnn_forward.1} parent=0 // pred_check_branch
    %1343 = sbr.rel (0) target = $region33
  $region32: #{rnn_forward.1} parent=0 // pred_region
    _
  $region33: #{rnn_forward.1} parent=0 // pred_fallthru
    _

</llo_original>
